<compile_context>
chip_gen: v7x
topology: tpu7x:2x2x1
jax: 0.10.0
libtpu: 0.0.40
codegen_flags: <defaults>
</compile_context>

<pallas_src>
import functools

import jax
import jax.numpy as jnp
from jax.experimental import pallas as pl
from jax.experimental.pallas import tpu as pltpu


# ----------------------------------------------------------------------------
# Kernel
# ----------------------------------------------------------------------------
def _ffn_kernel(x_ref, w1_ref, w3_ref, w2_ref, o_ref, *scratch):
    """Grid step (i = token tile, k = hidden tile).

    x_ref  : (TILE_M, D)      token tile, resident across k
    w1_ref : (D, TILE_H)      gate-projection tile (W1^T)
    w3_ref : (D, TILE_H)      up-projection tile (W3^T)
    w2_ref : (TILE_H, D)      down-projection tile (W2^T)
    o_ref  : (TILE_M, D)      output tile, resident across k
    scratch: optional f32 (TILE_M, D) accumulator (only when o_ref is not f32;
             for f32 outputs we accumulate directly into o_ref and save VMEM).
    """
    acc_ref = scratch[0] if scratch else o_ref
    k = pl.program_id(1)

    @pl.when(k == 0)
    def _():
        acc_ref[...] = jnp.zeros_like(acc_ref)

    x = x_ref[...]
    # Gate / up projections on the MXU, f32 accumulation.
    h1 = jnp.dot(x, w1_ref[...], preferred_element_type=jnp.float32)
    h3 = jnp.dot(x, w3_ref[...], preferred_element_type=jnp.float32)
    # SiLU gate in f32: sigmoid on the EUP, multiplies on the VPU.
    gated = (h1 * jax.nn.sigmoid(h1)) * h3
    acc_ref[...] += jnp.dot(
        gated.astype(w2_ref.dtype), w2_ref[...], preferred_element_type=jnp.float32
    )

    if scratch:  # static: only emitted when a separate accumulator exists
        @pl.when(k == pl.num_programs(1) - 1)
        def _():
            o_ref[...] = acc_ref[...].astype(o_ref.dtype)


# ----------------------------------------------------------------------------
# Tile selection / VMEM budgeting (device-aware)
# ----------------------------------------------------------------------------
def _round_up(x, m):
    return (x + m - 1) // m * m


def _device_kind():
    try:
        return jax.devices()[0].device_kind
    except Exception:
        return ""


def _vmem_capacity_bytes(kind):
    try:
        cap = getattr(pltpu.get_tpu_info(), "vmem_capacity_bytes", None)
        if cap:
            return int(cap)
    except Exception:
        pass
    return (64 if "v7" in kind.lower() else 128) * 1024 * 1024


def _hidden_tile_candidates(H, want_h):
    """Multiples of 128 that divide H, descending, capped at want_h."""
    if H % 128 != 0:
        # Guard: un-tileable hidden dim -> single full-H tile; the VMEM fit is
        # still enforced by _select_tiles below.
        return [H]
    cap = max(want_h, 128)
    cands = [t for t in range(128, H + 1, 128) if H % t == 0 and t <= cap]
    return sorted(cands, reverse=True) or [H]


def _vmem_needed(tile_m, tile_h, D, c_bytes, o_bytes, separate_acc):
    n = 2 * tile_m * D * c_bytes           # x tile (double-buffered)
    n += 2 * D * tile_h * c_bytes * 2      # W1^T + W3^T tiles (double-buffered)
    n += 2 * tile_h * D * c_bytes          # W2^T tile (double-buffered)
    n += 2 * tile_m * D * o_bytes          # out tile (double-buffered)
    if separate_acc:
        n += tile_m * D * 4                # f32 accumulator scratch
    n += 3 * tile_m * tile_h * 4           # h1 / h3 / gated f32 intermediates
    n += tile_m * tile_h * c_bytes         # gated cast back to compute dtype
    return n


def _select_tiles(M, D, H, c_bytes, o_bytes, separate_acc, kind, vmem_budget,
                  tile_m=None, tile_h=None):
    """Pick (tile_m, tile_h) that fit the VMEM budget.

    Shrinks tile_h first and tile_m last: tile_m is the only knob that reduces
    total weight HBM traffic (ceil(M/tile_m) * 3*D*H*bytes), tile_h only trades
    VMEM for grid-step count.
    """
    k = kind.lower()
    if tile_m is None:
        tile_m = 1024 if "v6" in k else 512   # v6e: 128 MiB VMEM; v5e/v7x: 512
    if tile_h is None:
        tile_h = 1024 if "v6" in k else 512
    # Token tile: multiple of 8 sublanes, no larger than (padded) M.
    tile_m = min(tile_m, _round_up(M, 8))
    tile_m = max(8, (tile_m // 8) * 8)
    th_cands = _hidden_tile_candidates(H, tile_h)

    tm = tile_m
    while True:
        for th in th_cands:
            if _vmem_needed(tm, th, D, c_bytes, o_bytes, separate_acc) * 1.25 <= vmem_budget:
                return tm, th
        if tm <= 8:
            raise ValueError(
                f"FeedForward tiles do not fit VMEM (D={D}, H={H}, "
                f"budget={vmem_budget} bytes)")
        tm = max(8, (tm // 2 // 8) * 8)


# ----------------------------------------------------------------------------
# Public API
# ----------------------------------------------------------------------------
def prepare_feed_forward_weights(w1, w2, w3, compute_dtype=jnp.bfloat16):
    """One-time weight prep (call at model init, NOT per forward pass).

    w1, w3 : (hidden, dim)  PyTorch nn.Linear layout (out_features, in_features)
    w2     : (dim, hidden)

    Returns (w1_t, w3_t, w2_t) in (in, out) layout, cast to the compute dtype,
    so the per-call path does zero HBM weight shuffling.
    """
    w1_t = jnp.asarray(w1).T.astype(compute_dtype)
    w3_t = jnp.asarray(w3).T.astype(compute_dtype)
    w2_t = jnp.asarray(w2).T.astype(compute_dtype)
    return jax.block_until_ready((w1_t, w3_t, w2_t))


@functools.partial(
    jax.jit,
    static_argnames=("tile_m", "tile_h", "vmem_limit", "core_parallel"))
def _feed_forward_call(x, w1_t, w3_t, w2_t, *, tile_m, tile_h, vmem_limit,
                       core_parallel):
    B, S, D = x.shape
    H = w1_t.shape[1]
    M = B * S
    M_pad = _round_up(M, tile_m)

    compute_dtype = w1_t.dtype
    x2d = x.reshape(M, D).astype(compute_dtype)
    if M_pad != M:
        # Zero padding flows harmlessly through matmul/SiLU and is sliced off.
        x2d = jnp.pad(x2d, ((0, M_pad - M), (0, 0)))

    out_dtype = x.dtype
    separate_acc = out_dtype != jnp.float32
    scratch = ([pltpu.VMEM((tile_m, D), jnp.float32)] if separate_acc else [])

    # On v7x, shard the token-tile axis across the 2 TensorCores.
    m_sem = pltpu.CORE_PARALLEL if core_parallel else "parallel"

    out2d = pl.pallas_call(
        _ffn_kernel,
        out_shape=jax.ShapeDtypeStruct((M_pad, D), out_dtype),
        grid_spec=pltpu.PrefetchScalarGridSpec(
            num_scalar_prefetch=0,
            grid=(M_pad // tile_m, H // tile_h),   # (token tiles, hidden tiles)
            in_specs=[
                pl.BlockSpec((tile_m, D), lambda i, k: (i, 0)),   # x (resident over k)
                pl.BlockSpec((D, tile_h), lambda i, k: (0, k)),   # W1^T hidden tile
                pl.BlockSpec((D, tile_h), lambda i, k: (0, k)),   # W3^T hidden tile
                pl.BlockSpec((tile_h, D), lambda i, k: (k, 0)),   # W2^T hidden tile
            ],
            out_specs=pl.BlockSpec((tile_m, D), lambda i, k: (i, 0)),
            scratch_shapes=scratch,
        ),
        compiler_params=pltpu.CompilerParams(
            dimension_semantics=(m_sem, "arbitrary"),  # M parallel, hidden reduce
            vmem_limit_bytes=vmem_limit,
        ),
    )(x2d, w1_t, w3_t, w2_t)

    return out2d[:M].reshape(B, S, D)


def feed_forward(x, w1_t, w3_t, w2_t, *, tile_m=None, tile_h=None):
    """x: (batch, seq, dim); w1_t/w3_t: (dim, hidden); w2_t: (hidden, dim).

    Weights should already be in their compute dtype (see
    prepare_feed_forward_weights) so no per-call HBM shuffling occurs.  Numerics
    match bf16 matmuls with f32 accumulation when the weights are bf16.
    Tile selection is device-aware: tile_m (the only knob that reduces total
    weight HBM traffic) targets ~1024 on v6e and ~512 on v5e/v7x; both tiles
    are shrunk (tile_h first) until the working set fits ~90% of physical VMEM.
    """
    B, S, D = x.shape
    H = w1_t.shape[1]
    M = B * S

    kind = _device_kind()
    vmem_cap = _vmem_capacity_bytes(kind)
    vmem_budget = int(vmem_cap * 0.9)            # ~10% headroom under physical VMEM

    c_bytes = jnp.dtype(w1_t.dtype).itemsize
    o_bytes = jnp.dtype(x.dtype).itemsize
    separate_acc = x.dtype != jnp.float32        # f32 output accumulates in-place

    tm, th = _select_tiles(M, D, H, c_bytes, o_bytes, separate_acc, kind,
                           vmem_budget, tile_m=tile_m, tile_h=tile_h)
    needed = _vmem_needed(tm, th, D, c_bytes, o_bytes, separate_acc)
    vmem_limit = min(vmem_budget, max(int(needed * 1.25), 32 * 1024 * 1024))

    core_parallel = "v7" in kind.lower()

    return _feed_forward_call(x, w1_t, w3_t, w2_t, tile_m=tm, tile_h=th,
                              vmem_limit=vmem_limit, core_parallel=core_parallel)


def llama_hidden_dim(hidden_dim, multiple_of, ffn_dim_multiplier=None):
    hidden_dim = int(2 * hidden_dim / 3)
    if ffn_dim_multiplier is not None:
        hidden_dim = int(ffn_dim_multiplier * hidden_dim)
    hidden_dim = multiple_of * ((hidden_dim + multiple_of - 1) // multiple_of)
    return hidden_dim


if __name__ == "__main__":
    # Small llama-like config.
    batch, seq = 2, 8
    dim = 256
    multiple_of = 128
    hidden_dim = llama_hidden_dim(4 * dim, multiple_of, None)  # -> 768

    key = jax.random.PRNGKey(0)
    kx, k1, k2, k3 = jax.random.split(key, 4)

    x = jax.random.normal(kx, (batch, seq, dim), dtype=jnp.float32)
    # PyTorch nn.Linear stores weight as (out_features, in_features).
    w1 = jax.random.normal(k1, (hidden_dim, dim), dtype=jnp.float32) / jnp.sqrt(dim)
    w3 = jax.random.normal(k3, (hidden_dim, dim), dtype=jnp.float32) / jnp.sqrt(dim)
    w2 = jax.random.normal(k2, (dim, hidden_dim), dtype=jnp.float32) / jnp.sqrt(hidden_dim)

    # One-time weight prep (transpose + cast) -- outside the per-call path.
    w1_t, w3_t, w2_t = prepare_feed_forward_weights(w1, w2, w3, jnp.bfloat16)

    out = feed_forward(x, w1_t, w3_t, w2_t)
    out = jax.block_until_ready(out)

    # Reference with matching numerics (bf16 matmuls, f32 accumulation).
    # The 2e-2 tolerance reflects bf16 compute vs. the PyTorch f32 reference.
    cd = jnp.bfloat16
    x2d = x.reshape(-1, dim).astype(cd)
    h1 = jnp.dot(x2d, w1.T.astype(cd), preferred_element_type=jnp.float32)
    h3 = jnp.dot(x2d, w3.T.astype(cd), preferred_element_type=jnp.float32)
    g = (h1 * jax.nn.sigmoid(h1)) * h3
    ref = jnp.dot(g.astype(cd), w2.T.astype(cd),
                  preferred_element_type=jnp.float32).astype(x.dtype)
    ref = ref.reshape(batch, seq, dim)

    assert out.shape == (batch, seq, dim)
    assert jnp.allclose(out, ref, atol=2e-2, rtol=2e-2), "mismatch vs reference"

    print("KERNEL_OK")
</pallas_src>

<mosaic_0001>
module attributes {stable_mosaic.version = 11 : i64} {
  func.func @_ffn_kernel(%arg0: i32, %arg1: i32, %arg2: memref<16x256xbf16, #tpu.memory_space<vmem>>, %arg3: memref<256x384xbf16, #tpu.memory_space<vmem>>, %arg4: memref<256x384xbf16, #tpu.memory_space<vmem>>, %arg5: memref<384x256xbf16, #tpu.memory_space<vmem>>, %arg6: memref<16x256xf32, #tpu.memory_space<vmem>>) attributes {dimension_semantics = [#tpu.dimension_semantics<parallel>, #tpu.dimension_semantics<arbitrary>], iteration_bounds = array<i64: 1, 2>, scalar_prefetch = 0 : i64, scratch_operands = 0 : i64, tpu.core_type = #tpu.core_type<tc>, window_params = [{transform_indices = @transform_0, window_bounds = array<i64: 16, 256>}, {transform_indices = @transform_1, window_bounds = array<i64: 256, 384>}, {transform_indices = @transform_2, window_bounds = array<i64: 256, 384>}, {transform_indices = @transform_3, window_bounds = array<i64: 384, 256>}, {transform_indices = @transform_4, window_bounds = array<i64: 16, 256>}]} {
    %c0_i32 = arith.constant 0 : i32
    %0 = arith.cmpi eq, %arg1, %c0_i32 : i32
    %1 = arith.extui %0 : i1 to i32
    %c0_i32_0 = arith.constant 0 : i32
    %2 = arith.cmpi ne, %1, %c0_i32_0 : i32
    scf.if %2 {
      %cst_15 = arith.constant 0.000000e+00 : f32
      %21 = vector.broadcast %cst_15 : f32 to vector<16x256xf32>
      %c0_16 = arith.constant 0 : index
      %c0_17 = arith.constant 0 : index
      %22 = vector.load %arg6[%c0_16, %c0_17] : memref<16x256xf32, #tpu.memory_space<vmem>>, vector<16x256xf32>
      tpu.vector_store %arg6[%c0_16, %c0_17], %21 {strides = array<i32>} : memref<16x256xf32, #tpu.memory_space<vmem>>, vector<16x256xf32>,
    } else {
    }
    %c0 = arith.constant 0 : index
    %c0_1 = arith.constant 0 : index
    %3 = vector.load %arg2[%c0, %c0_1] : memref<16x256xbf16, #tpu.memory_space<vmem>>, vector<16x256xbf16>
    %c0_2 = arith.constant 0 : index
    %c0_3 = arith.constant 0 : index
    %4 = vector.load %arg3[%c0_2, %c0_3] : memref<256x384xbf16, #tpu.memory_space<vmem>>, vector<256x384xbf16>
    %cst = arith.constant dense<0.000000e+00> : vector<16x384xf32>
    %5 = tpu.matmul %3, %4, %cst {dimension_numbers = #tpu.dot_dimension_numbers<[1], [0], [0], [1], [0, 0, 1, 1], [], []>} : vector<16x256xbf16>, vector<256x384xbf16>, vector<16x384xf32> -> vector<16x384xf32>
    %c0_4 = arith.constant 0 : index
    %c0_5 = arith.constant 0 : index
    %6 = vector.load %arg4[%c0_4, %c0_5] : memref<256x384xbf16, #tpu.memory_space<vmem>>, vector<256x384xbf16>
    %cst_6 = arith.constant dense<0.000000e+00> : vector<16x384xf32>
    %7 = tpu.matmul %3, %6, %cst_6 {dimension_numbers = #tpu.dot_dimension_numbers<[1], [0], [0], [1], [0, 0, 1, 1], [], []>} : vector<16x256xbf16>, vector<256x384xbf16>, vector<16x384xf32> -> vector<16x384xf32>
    %8 = arith.negf %5 : vector<16x384xf32>
    %9 = math.exp %8 : vector<16x384xf32>
    %cst_7 = arith.constant 1.000000e+00 : f32
    %10 = vector.broadcast %cst_7 : f32 to vector<16x384xf32>
    %11 = arith.addf %10, %9 : vector<16x384xf32>
    %12 = arith.divf %10, %11 : vector<16x384xf32>
    %13 = arith.mulf %5, %12 : vector<16x384xf32>
    %14 = arith.mulf %13, %7 : vector<16x384xf32>
    %c0_8 = arith.constant 0 : index
    %c0_9 = arith.constant 0 : index
    %15 = vector.load %arg6[%c0_8, %c0_9] : memref<16x256xf32, #tpu.memory_space<vmem>>, vector<16x256xf32>
    %16 = arith.truncf %14 : vector<16x384xf32> to vector<16x384xbf16>
    %c0_10 = arith.constant 0 : index
    %c0_11 = arith.constant 0 : index
    %17 = vector.load %arg5[%c0_10, %c0_11] : memref<384x256xbf16, #tpu.memory_space<vmem>>, vector<384x256xbf16>
    %cst_12 = arith.constant dense<0.000000e+00> : vector<16x256xf32>
    %18 = tpu.matmul %16, %17, %cst_12 {dimension_numbers = #tpu.dot_dimension_numbers<[1], [0], [0], [1], [0, 0, 1, 1], [], []>} : vector<16x384xbf16>, vector<384x256xbf16>, vector<16x256xf32> -> vector<16x256xf32>
    %19 = arith.addf %15, %18 : vector<16x256xf32>
    %c0_13 = arith.constant 0 : index
    %c0_14 = arith.constant 0 : index
    %20 = vector.load %arg6[%c0_13, %c0_14] : memref<16x256xf32, #tpu.memory_space<vmem>>, vector<16x256xf32>
    tpu.vector_store %arg6[%c0_13, %c0_14], %19 {strides = array<i32>} : memref<16x256xf32, #tpu.memory_space<vmem>>, vector<16x256xf32>,
    return
  }
  func.func @transform_0(%arg0: i32, %arg1: i32) -> (i32, i32) {
    %c0_i32 = arith.constant 0 : i32
    %c0_i32_0 = arith.constant 0 : i32
    return %arg0, %c0_i32 : i32, i32
  }
  func.func @transform_1(%arg0: i32, %arg1: i32) -> (i32, i32) {
    %c0_i32 = arith.constant 0 : i32
    %c0_i32_0 = arith.constant 0 : i32
    return %c0_i32, %arg1 : i32, i32
  }
  func.func @transform_2(%arg0: i32, %arg1: i32) -> (i32, i32) {
    %c0_i32 = arith.constant 0 : i32
    %c0_i32_0 = arith.constant 0 : i32
    return %c0_i32, %arg1 : i32, i32
  }
  func.func @transform_3(%arg0: i32, %arg1: i32) -> (i32, i32) {
    %c0_i32 = arith.constant 0 : i32
    %c0_i32_0 = arith.constant 0 : i32
    return %arg1, %c0_i32 : i32, i32
  }
  func.func @transform_4(%arg0: i32, %arg1: i32) -> (i32, i32) {
    %c0_i32 = arith.constant 0 : i32
    %c0_i32_0 = arith.constant 0 : i32
    return %arg0, %c0_i32 : i32, i32
  }
}

</mosaic_0001>

<llo_original>
// kernel: _feed_forward_call.1
$region0: #{_feed_forward_call.1}
  #allocation0 [shape = 'u32[]', space=smem, size = 0x4, offset = 0x4, fixed_abs, tag = 'smem constant byte address 0x4 - core index']
  #allocation1 [shape = 'u32[144,128]{1,0:T(1,128)}', space=vmem, size = 0x12000, scoped, tag = 'internal scratch']
  %s0 = inlined_call_operand.vmem [shape: bf16[16,256], index: 0, kind: input, shape index: {}]
  %s1 = inlined_call_operand.hbm [shape: bf16[256,768], index: 1, kind: input, shape index: {}]
  %s2 = inlined_call_operand.hbm [shape: bf16[256,768], index: 2, kind: input, shape index: {}]
  %s3 = inlined_call_operand.hbm [shape: bf16[768,256], index: 3, kind: input, shape index: {}]
  %s4 = inlined_call_operand.hbm [shape: f32[16,256], index: 4, kind: output, shape index: {}]
  %s5 = sld [smem:[#allocation0]]
  $region65: #{_feed_forward_call.1} parent=0
    _
  %s7 = ssub.s32 1, %s5
  %s8 = scalar_select 0, %s7, %s5
  $region1: #{_feed_forward_call.1} parent=0
    #allocation2 [shape = 'u8[393216]{0}', space=vmem, size = 0x60000, scoped, tag = 'input window, operand 1']
    #allocation3 [shape = 's32[2]{0}', space=sflag, size = 0x8, scoped, tag = 'scoped memory for _feed_forward_call.1']
    #allocation4 [shape = 's32[2]{0}', space=sflag, size = 0x8, scoped, tag = 'scoped memory for _feed_forward_call.1']
    #allocation5 [shape = 'u8[393216]{0}', space=vmem, size = 0x60000, scoped, tag = 'input window, operand 2']
    #allocation6 [shape = 's32[2]{0}', space=sflag, size = 0x8, scoped, tag = 'scoped memory for _feed_forward_call.1']
    #allocation7 [shape = 'u8[393216]{0}', space=vmem, size = 0x60000, scoped, tag = 'input window, operand 3']
    #allocation8 [shape = 'u8[16384]{0}', space=vmem, size = 0x4000, scoped, tag = 'output window, operand 0, single buffered']
    %9 = vsyncpa [#allocation3], 0
    %s10 = scalar_lea.sflag [#allocation3], 1
    %11 = vsyncpa %s10, 0
    %12 = vsyncpa [#allocation6], 0
    %s13 = scalar_lea.sflag [#allocation6], 1
    %14 = vsyncpa %s13, 0
    %15 = vsyncpa [#allocation4], 0
    loop: start=0, step=1, limit=4
    $region2: #{_feed_forward_call.1} parent=1 // loop_pre_header
      _
    $region3: #{_feed_forward_call.1} parent=1 // loop_header
      %s17 = sphi 0, %s21
      %p18 = scmp.ge.s32.totalorder %s17, 4
      %s24 = sphi 0, %s36
      %s25 = sphi 0, %s32
      %s26 = sphi 0, %s24
      %s27 = sphi 0, %s25
      %s28 = sphi 0, %s26
      %s29 = sphi 0, %s27
      %s39 = sphi 0, %s41
      %s42 = sphi 0, %s39
      %s43 = sphi 0, %s42
      %s59 = sphi 0, %s43
      %s65 = sphi 0, %s67
      %s68 = sphi 0, %s65
      %s69 = sphi 0, %s68
      %s85 = sphi 0, %s69
      %s91 = sphi 0, %s93
      %s94 = sphi 0, %s91
      %s95 = sphi 0, %s94
      %s111 = sphi 0, %s95
      %s117 = sphi 0, %s119
      %s120 = sphi 0, %s117
      %s121 = sphi 0, %s120
      %s137 = sphi 0, %s121
      %s143 = sphi 0, %s145
      %s146 = sphi 0, %s143
      %s147 = sphi 0, %s146
      %s163 = sphi 0, %s147
    $region4: #{_feed_forward_call.1} parent=1 // loop_header_branch
      %20 = sbr.rel (%p18) target = $region8
    $region5: #{_feed_forward_call.1} parent=1 // loop_body
      %s22 = ssub.s32 %s17, 1
      %s23 = ssub.s32 %s17, 2
      %s30 = sadd.s32 1, %s25
      %p31 = scmp.ge.s32.totalorder %s30, 2
      %s32 = scalar_select %p31, 0, %s30
      %s33 = sadd.s32 1, %s24
      %s34 = scalar_select %p31, %s33, %s24
      %p35 = scmp.ge.s32.totalorder %s34, 1
      %s36 = scalar_select %p35, 0, %s34
      %s37 = ssub.s32 %s24, %s36
      %p38 = scmp.eq.s32.totalorder %s37, 0
      %s40 = sadd.s32 %s39, 1
      %s41 = scalar_select %p38, %s39, %s40
      %p44 = pneg %p38
      %p45 = scmp.eq.s32.totalorder %s17, 1
      %p46 = por %p44, %p45
      %p47 = scmp.ne.s32.totalorder %s39, %s42
      %p48 = scmp.eq.s32.totalorder %s17, 0
      %p49 = por %p47, %p48
      %p50 = scmp.ne.s32.totalorder %s39, %s42
      %p51 = scmp.eq.s32.totalorder %s22, 1
      %p52 = por %p50, %p51
      %p53 = scmp.ne.s32.totalorder %s42, %s43
      %p54 = scmp.eq.s32.totalorder %s22, 0
      %p55 = por %p53, %p54
      %p56 = scmp.ne.s32.totalorder %s42, %s43
      %p57 = scmp.eq.s32.totalorder %s23, 1
      %p58 = por %p56, %p57
      %p60 = scmp.ne.s32.totalorder %s43, %s59
      %p61 = scmp.eq.s32.totalorder %s23, 0
      %p62 = por %p60, %p61
      %s63 = ssub.s32 %s25, %s32
      %p64 = scmp.eq.s32.totalorder %s63, 0
      %s66 = sadd.s32 %s65, 1
      %s67 = scalar_select %p64, %s65, %s66
      %p70 = pneg %p64
      %p71 = scmp.eq.s32.totalorder %s17, 1
      %p72 = por %p70, %p71
      %p73 = scmp.ne.s32.totalorder %s65, %s68
      %p74 = scmp.eq.s32.totalorder %s17, 0
      %p75 = por %p73, %p74
      %p76 = scmp.ne.s32.totalorder %s65, %s68
      %p77 = scmp.eq.s32.totalorder %s22, 1
      %p78 = por %p76, %p77
      %p79 = scmp.ne.s32.totalorder %s68, %s69
      %p80 = scmp.eq.s32.totalorder %s22, 0
      %p81 = por %p79, %p80
      %p82 = scmp.ne.s32.totalorder %s68, %s69
      %p83 = scmp.eq.s32.totalorder %s23, 1
      %p84 = por %p82, %p83
      %p86 = scmp.ne.s32.totalorder %s69, %s85
      %p87 = scmp.eq.s32.totalorder %s23, 0
      %p88 = por %p86, %p87
      %s89 = ssub.s32 %s25, %s32
      %p90 = scmp.eq.s32.totalorder %s89, 0
      %s92 = sadd.s32 %s91, 1
      %s93 = scalar_select %p90, %s91, %s92
      %p96 = pneg %p90
      %p97 = scmp.eq.s32.totalorder %s17, 1
      %p98 = por %p96, %p97
      %p99 = scmp.ne.s32.totalorder %s91, %s94
      %p100 = scmp.eq.s32.totalorder %s17, 0
      %p101 = por %p99, %p100
      %p102 = scmp.ne.s32.totalorder %s91, %s94
      %p103 = scmp.eq.s32.totalorder %s22, 1
      %p104 = por %p102, %p103
      %p105 = scmp.ne.s32.totalorder %s94, %s95
      %p106 = scmp.eq.s32.totalorder %s22, 0
      %p107 = por %p105, %p106
      %p108 = scmp.ne.s32.totalorder %s94, %s95
      %p109 = scmp.eq.s32.totalorder %s23, 1
      %p110 = por %p108, %p109
      %p112 = scmp.ne.s32.totalorder %s95, %s111
      %p113 = scmp.eq.s32.totalorder %s23, 0
      %p114 = por %p112, %p113
      %s115 = ssub.s32 %s25, %s32
      %p116 = scmp.eq.s32.totalorder %s115, 0
      %s118 = sadd.s32 %s117, 1
      %s119 = scalar_select %p116, %s117, %s118
      %p122 = pneg %p116
      %p123 = scmp.eq.s32.totalorder %s17, 1
      %p124 = por %p122, %p123
      %p125 = scmp.ne.s32.totalorder %s117, %s120
      %p126 = scmp.eq.s32.totalorder %s17, 0
      %p127 = por %p125, %p126
      %p128 = scmp.ne.s32.totalorder %s117, %s120
      %p129 = scmp.eq.s32.totalorder %s22, 1
      %p130 = por %p128, %p129
      %p131 = scmp.ne.s32.totalorder %s120, %s121
      %p132 = scmp.eq.s32.totalorder %s22, 0
      %p133 = por %p131, %p132
      %p134 = scmp.ne.s32.totalorder %s120, %s121
      %p135 = scmp.eq.s32.totalorder %s23, 1
      %p136 = por %p134, %p135
      %p138 = scmp.ne.s32.totalorder %s121, %s137
      %p139 = scmp.eq.s32.totalorder %s23, 0
      %p140 = por %p138, %p139
      %s141 = ssub.s32 %s24, %s36
      %p142 = scmp.eq.s32.totalorder %s141, 0
      %s144 = sadd.s32 %s143, 1
      %s145 = scalar_select %p142, %s143, %s144
      %p148 = pneg %p142
      %p149 = scmp.eq.s32.totalorder %s17, 1
      %p150 = por %p148, %p149
      %p151 = scmp.ne.s32.totalorder %s143, %s146
      %p152 = scmp.eq.s32.totalorder %s17, 0
      %p153 = por %p151, %p152
      %p154 = scmp.ne.s32.totalorder %s143, %s146
      %p155 = scmp.eq.s32.totalorder %s22, 1
      %p156 = por %p154, %p155
      %p157 = scmp.ne.s32.totalorder %s146, %s147
      %p158 = scmp.eq.s32.totalorder %s22, 0
      %p159 = por %p157, %p158
      %p160 = scmp.ne.s32.totalorder %s146, %s147
      %p161 = scmp.eq.s32.totalorder %s23, 1
      %p162 = por %p160, %p161
      %p164 = scmp.ne.s32.totalorder %s147, %s163
      %p165 = scmp.eq.s32.totalorder %s23, 0
      %p166 = por %p164, %p165
      %p167 = scmp.le.s32.totalorder 1, %s17
      %p168 = scmp.lt.s32.totalorder %s17, 3
      %p169 = pnand %p167, %p168
      %p170 = pneg %p169
      // Predicated region
      $region9: #{_feed_forward_call.1} parent=5 // pred_check
        _
      $region10: #{_feed_forward_call.1} parent=5 // pred_check_branch
        %172 = sbr.rel (%p169) target = $region12
      $region11: #{_feed_forward_call.1} parent=5 // pred_region
        %s173 = ssub.s32 %s17, 1
        // Predicated region
        $region13: #{_feed_forward_call.1} parent=11 // pred_check
          %p174 = pneg %p55
        $region14: #{_feed_forward_call.1} parent=11 // pred_check_branch
          %176 = sbr.rel (%p174) target = $region16
        $region15: #{_feed_forward_call.1} parent=11 // pred_region
          %s177 = smul.u32 2, %s26
          %p178 = scmp.lt.s32.totalorder %s177, 1
          %s179 = scalar_select %p178, %s177, 1
          %s180 = smul.addr %s179, 2
          %s181 = smul.addr %s180, 4
          %s182 = scalar_lea.vmem %s0, %s181
          %s183 = smul.u32 2, %s26
        $region16: #{_feed_forward_call.1} parent=11 // pred_fallthru
          _
      $region12: #{_feed_forward_call.1} parent=5 // pred_fallthru
        _
      %p184 = scmp.lt.s32.totalorder %s17, 2
      // Predicated region
      $region17: #{_feed_forward_call.1} parent=5 // pred_check
        %p185 = pneg %p184
      $region18: #{_feed_forward_call.1} parent=5 // pred_check_branch
        %187 = sbr.rel (%p185) target = $region20
      $region19: #{_feed_forward_call.1} parent=5 // pred_region
        // Predicated region
        $region21: #{_feed_forward_call.1} parent=19 // pred_check
          %p188 = pneg %p75
        $region22: #{_feed_forward_call.1} parent=19 // pred_check_branch
          %190 = sbr.rel (%p188) target = $region24
        $region23: #{_feed_forward_call.1} parent=19 // pred_region
          %s191 = sand.u32 %s65, 1
          %s192 = scalar_lea.sflag [#allocation3], %s191
          %s193 = sand.u32 %s65, 1
          %s194 = smul.addr %s193, 384
          %s195 = scalar_lea.vmem [#allocation2], %s194
          %s196 = smul.u32 3, %s25
          %s198 = ssub.s32 6144, 6144
          %199 = vsyncadd %s192, %s198
          %s200 = smul.addr %s196, 64
          %s201 = scalar_lea.hbm %s1, %s200
          %s202 = sshll.u32 %s195, 4
          %s203 = int_to_ptr.vmem [resolvable:$true] %s202
          %208 = dma.hbm_to_vmem [thread:$0]  %s201, 6144, %s203, %s192, 384, 192, 12
        $region24: #{_feed_forward_call.1} parent=19 // pred_fallthru
          _
        // Predicated region
        $region25: #{_feed_forward_call.1} parent=19 // pred_check
          %p209 = pneg %p101
        $region26: #{_feed_forward_call.1} parent=19 // pred_check_branch
          %211 = sbr.rel (%p209) target = $region28
        $region27: #{_feed_forward_call.1} parent=19 // pred_region
          %s212 = sand.u32 %s17, 1
          %s213 = scalar_lea.sflag [#allocation6], %s212
          %s214 = sand.u32 %s91, 1
          %s215 = smul.addr %s214, 384
          %s216 = scalar_lea.vmem [#allocation5], %s215
          %s217 = smul.u32 3, %s25
          %s219 = ssub.s32 6144, 6144
          %220 = vsyncadd %s213, %s219
          %s221 = smul.addr %s217, 64
          %s222 = scalar_lea.hbm %s2, %s221
          %s223 = sshll.u32 %s216, 4
          %s224 = int_to_ptr.vmem [resolvable:$true] %s223
          %229 = dma.hbm_to_vmem [thread:$0]  %s222, 6144, %s224, %s213, 384, 192, 12
        $region28: #{_feed_forward_call.1} parent=19 // pred_fallthru
          _
        // Predicated region
        $region29: #{_feed_forward_call.1} parent=19 // pred_check
          %p230 = pneg %p127
        $region30: #{_feed_forward_call.1} parent=19 // pred_check_branch
          %232 = sbr.rel (%p230) target = $region32
        $region31: #{_feed_forward_call.1} parent=19 // pred_region
          %s233 = sand.u32 %s17, 1
          %s234 = scalar_lea.sflag [#allocation6], %s233
          %s235 = sand.u32 %s117, 1
          %s236 = smul.addr %s235, 384
          %s237 = scalar_lea.vmem [#allocation7], %s236
          %s238 = smul.u32 48, %s25
          %s240 = ssub.s32 6144, 6144
          %241 = vsyncadd %s234, %s240
          %s242 = smul.addr %s238, 2
          %s243 = smul.addr %s242, 64
          %s244 = scalar_lea.hbm %s3, %s243
          %s245 = sshll.u32 %s237, 4
          %s246 = int_to_ptr.vmem [resolvable:$true] %s245
          %251 = dma.hbm_to_vmem [thread:$0]  %s244, 6144, %s246, %s234, 128, 128, 8
        $region32: #{_feed_forward_call.1} parent=19 // pred_fallthru
          _
      $region20: #{_feed_forward_call.1} parent=5 // pred_fallthru
        _
      %p252 = scmp.le.s32.totalorder 1, %s17
      %p253 = scmp.lt.s32.totalorder %s17, 3
      %p254 = pnand %p252, %p253
      %p255 = pneg %p254
      // Predicated region
      $region33: #{_feed_forward_call.1} parent=5 // pred_check
        _
      $region34: #{_feed_forward_call.1} parent=5 // pred_check_branch
        %257 = sbr.rel (%p254) target = $region36
      $region35: #{_feed_forward_call.1} parent=5 // pred_region
        %s258 = ssub.s32 %s17, 1
        %s259 = sand.u32 %s68, 1
        %s260 = scalar_lea.sflag [#allocation3], %s259
        %s261 = sand.u32 %s68, 1
        %s262 = smul.addr %s261, 384
        %s263 = scalar_lea.vmem [#allocation2], %s262
        // Predicated region
        $region37: #{_feed_forward_call.1} parent=35 // pred_check
          %p264 = pneg %p81
        $region38: #{_feed_forward_call.1} parent=35 // pred_check_branch
          %266 = sbr.rel (%p264) target = $region40
        $region39: #{_feed_forward_call.1} parent=35 // pred_region
          %267 = dma.done %s260, 6144
        $region40: #{_feed_forward_call.1} parent=35 // pred_fallthru
          _
        %s268 = sand.u32 %s22, 1
        %s269 = scalar_lea.sflag [#allocation6], %s268
        %s270 = sand.u32 %s94, 1
        %s271 = smul.addr %s270, 384
        %s272 = scalar_lea.vmem [#allocation5], %s271
        // Predicated region
        $region41: #{_feed_forward_call.1} parent=35 // pred_check
          %p273 = pneg %p107
        $region42: #{_feed_forward_call.1} parent=35 // pred_check_branch
          %275 = sbr.rel (%p273) target = $region44
        $region43: #{_feed_forward_call.1} parent=35 // pred_region
          %276 = dma.done %s269, 6144
        $region44: #{_feed_forward_call.1} parent=35 // pred_fallthru
          _
        %s277 = sand.u32 %s22, 1
        %s278 = scalar_lea.sflag [#allocation6], %s277
        %s279 = sand.u32 %s120, 1
        %s280 = smul.addr %s279, 384
        %s281 = scalar_lea.vmem [#allocation7], %s280
        // Predicated region
        $region45: #{_feed_forward_call.1} parent=35 // pred_check
          %p282 = pneg %p133
        $region46: #{_feed_forward_call.1} parent=35 // pred_check_branch
          %284 = sbr.rel (%p282) target = $region48
        $region47: #{_feed_forward_call.1} parent=35 // pred_region
          %285 = dma.done %s278, 6144
        $region48: #{_feed_forward_call.1} parent=35 // pred_fallthru
          _
        %s286 = smul.u32 2, %s26
        %p287 = scmp.lt.s32.totalorder %s286, 1
        %s288 = scalar_select %p287, %s286, 1
        %s289 = smul.addr %s288, 2
        %s290 = smul.addr %s289, 4
        %s291 = scalar_lea.vmem %s0, %s290
        %p292 = pneg %p55
        %p293 = pneg %p52
        %s294 = sand.u32 %s68, 1
        %s295 = scalar_lea.sflag [#allocation3], %s294
        %s296 = sand.u32 %s68, 1
        %s297 = smul.addr %s296, 384
        %s298 = scalar_lea.vmem [#allocation2], %s297
        %p299 = pneg %p81
        %p300 = pneg %p78
        %s301 = sand.u32 %s22, 1
        %s302 = scalar_lea.sflag [#allocation6], %s301
        %s303 = sand.u32 %s94, 1
        %s304 = smul.addr %s303, 384
        %s305 = scalar_lea.vmem [#allocation5], %s304
        %p306 = pneg %p107
        %p307 = pneg %p104
        %s308 = sand.u32 %s22, 1
        %s309 = scalar_lea.sflag [#allocation6], %s308
        %s310 = sand.u32 %s120, 1
        %s311 = smul.addr %s310, 384
        %s312 = scalar_lea.vmem [#allocation7], %s311
        %p313 = pneg %p133
        %p314 = pneg %p130
        %p315 = pneg %p159
        %p316 = pneg %p156
        %s317 = smul.u32 2, %s26
        %p318 = scmp.lt.s32.totalorder %s317, 1
        %s319 = scalar_select %p318, %s317, 1
        %s320 = smul.addr %s319, 2
        %s321 = smul.addr %s320, 4
        %s322 = scalar_lea.vmem %s0, %s321
        %s323 = smul.u32 2, %s26
        %s324 = smul.u32 3, %s27
        %s325 = smul.u32 3, %s27
        %s326 = smul.u32 48, %s27
        %s327 = smul.u32 2, %s26
        %p329 = scmp.eq.s32.totalorder %s27, 0
        // Predicated region
        $region49: #{_feed_forward_call.1} parent=35 // pred_check
          %p330 = pneg %p329
        $region50: #{_feed_forward_call.1} parent=35 // pred_check_branch
          %332 = sbr.rel (%p330) target = $region52
        $region51: #{_feed_forward_call.1} parent=35 // pred_region
          %333 = vst [vmem:[#allocation8] sm:$0xff] 0.0
          %334 = vst [vmem:[#allocation8 + $0x8] sm:$0xff] 0.0
          %335 = vst [vmem:[#allocation8 + $0x10] sm:$0xff] 0.0
          %336 = vst [vmem:[#allocation8 + $0x18] sm:$0xff] 0.0
        $region52: #{_feed_forward_call.1} parent=35 // pred_fallthru
          _
        %v337 = vld [vmem:[%s322] sm:$0xff]
        %v338 = vld [vmem:[%s322 + $0x8] sm:$0xff]
        %v339 = vld [vmem:[%s263] sm:$0xff]
        %v340 = vld [vmem:[%s263 + $0x8] sm:$0xf]
        %v341 = vld [vmem:[%s263 + $0xc] sm:$0xff]
        %v342 = vld [vmem:[%s263 + $0x14] sm:$0xf]
        %v343 = vld [vmem:[%s263 + $0x18] sm:$0xff]
        %v344 = vld [vmem:[%s263 + $0x20] sm:$0xf]
        %v345 = vld [vmem:[%s263 + $0x24] sm:$0xff]
        %v346 = vld [vmem:[%s263 + $0x2c] sm:$0xf]
        %v347 = vld [vmem:[%s263 + $0x30] sm:$0xff]
        %v348 = vld [vmem:[%s263 + $0x38] sm:$0xf]
        %v349 = vld [vmem:[%s263 + $0x3c] sm:$0xff]
        %v350 = vld [vmem:[%s263 + $0x44] sm:$0xf]
        %v351 = vld [vmem:[%s263 + $0x48] sm:$0xff]
        %v352 = vld [vmem:[%s263 + $0x50] sm:$0xf]
        %v353 = vld [vmem:[%s263 + $0x54] sm:$0xff]
        %v354 = vld [vmem:[%s263 + $0x5c] sm:$0xf]
        %v355 = vld [vmem:[%s263 + $0x60] sm:$0xff]
        %v356 = vld [vmem:[%s263 + $0x68] sm:$0xf]
        %v357 = vld [vmem:[%s263 + $0x6c] sm:$0xff]
        %v358 = vld [vmem:[%s263 + $0x74] sm:$0xf]
        %v359 = vld [vmem:[%s263 + $0x78] sm:$0xff]
        %v360 = vld [vmem:[%s263 + $0x80] sm:$0xf]
        %v361 = vld [vmem:[%s263 + $0x84] sm:$0xff]
        %v362 = vld [vmem:[%s263 + $0x8c] sm:$0xf]
        %v363 = vld [vmem:[%s263 + $0x90] sm:$0xff]
        %v364 = vld [vmem:[%s263 + $0x98] sm:$0xf]
        %v365 = vld [vmem:[%s263 + $0x9c] sm:$0xff]
        %v366 = vld [vmem:[%s263 + $0xa4] sm:$0xf]
        %v367 = vld [vmem:[%s263 + $0xa8] sm:$0xff]
        %v368 = vld [vmem:[%s263 + $0xb0] sm:$0xf]
        %v369 = vld [vmem:[%s263 + $0xb4] sm:$0xff]
        %v370 = vld [vmem:[%s263 + $0xbc] sm:$0xf]
        %v371 = vld [vmem:[%s263 + $0xc0] sm:$0xff]
        %v372 = vld [vmem:[%s263 + $0xc8] sm:$0xf]
        %v373 = vld [vmem:[%s263 + $0xcc] sm:$0xff]
        %v374 = vld [vmem:[%s263 + $0xd4] sm:$0xf]
        %v375 = vld [vmem:[%s263 + $0xd8] sm:$0xff]
        %v376 = vld [vmem:[%s263 + $0xe0] sm:$0xf]
        %v377 = vld [vmem:[%s263 + $0xe4] sm:$0xff]
        %v378 = vld [vmem:[%s263 + $0xec] sm:$0xf]
        %v379 = vld [vmem:[%s263 + $0xf0] sm:$0xff]
        %v380 = vld [vmem:[%s263 + $0xf8] sm:$0xf]
        %v381 = vld [vmem:[%s263 + $0xfc] sm:$0xff]
        %v382 = vld [vmem:[%s263 + $0x104] sm:$0xf]
        %v383 = vld [vmem:[%s263 + $0x108] sm:$0xff]
        %v384 = vld [vmem:[%s263 + $0x110] sm:$0xf]
        %v385 = vld [vmem:[%s263 + $0x114] sm:$0xff]
        %v386 = vld [vmem:[%s263 + $0x11c] sm:$0xf]
        %v387 = vld [vmem:[%s263 + $0x120] sm:$0xff]
        %v388 = vld [vmem:[%s263 + $0x128] sm:$0xf]
        %v389 = vld [vmem:[%s263 + $0x12c] sm:$0xff]
        %v390 = vld [vmem:[%s263 + $0x134] sm:$0xf]
        %v391 = vld [vmem:[%s263 + $0x138] sm:$0xff]
        %v392 = vld [vmem:[%s263 + $0x140] sm:$0xf]
        %v393 = vld [vmem:[%s263 + $0x144] sm:$0xff]
        %v394 = vld [vmem:[%s263 + $0x14c] sm:$0xf]
        %v395 = vld [vmem:[%s263 + $0x150] sm:$0xff]
        %v396 = vld [vmem:[%s263 + $0x158] sm:$0xf]
        %v397 = vld [vmem:[%s263 + $0x15c] sm:$0xff]
        %v398 = vld [vmem:[%s263 + $0x164] sm:$0xf]
        %v399 = vld [vmem:[%s263 + $0x168] sm:$0xff]
        %v400 = vld [vmem:[%s263 + $0x170] sm:$0xf]
        %v401 = vld [vmem:[%s263 + $0x174] sm:$0xff]
        %v402 = vld [vmem:[%s263 + $0x17c] sm:$0xf]
        %v405 = vunpack.c.l.b16 %v337
        %v406 = vunpack.c.h.b16 %v337
        %v407 = vunpack.c.l.b16 %v338
        %v408 = vunpack.c.h.b16 %v338
        %v409 = vpack.c.b16 %v407, %v405
        %v410 = vpack.c.b16 %v408, %v406
        %v477 = vunpack.c.l.b16 %v339
        %v478 = vunpack.c.h.b16 %v339
        %v479 = vunpack.c.l.b16 %v340
        %v480 = vunpack.c.l.b16 %v341
        %v481 = vunpack.c.h.b16 %v341
        %v482 = vunpack.c.l.b16 %v342
        %v483 = vunpack.c.l.b16 %v343
        %v484 = vunpack.c.h.b16 %v343
        %v485 = vunpack.c.l.b16 %v344
        %v486 = vunpack.c.l.b16 %v345
        %v487 = vunpack.c.h.b16 %v345
        %v488 = vunpack.c.l.b16 %v346
        %v489 = vunpack.c.l.b16 %v347
        %v490 = vunpack.c.h.b16 %v347
        %v491 = vunpack.c.l.b16 %v348
        %v492 = vunpack.c.l.b16 %v349
        %v493 = vunpack.c.h.b16 %v349
        %v494 = vunpack.c.l.b16 %v350
        %v495 = vunpack.c.l.b16 %v351
        %v496 = vunpack.c.h.b16 %v351
        %v497 = vunpack.c.l.b16 %v352
        %v498 = vunpack.c.l.b16 %v353
        %v499 = vunpack.c.h.b16 %v353
        %v500 = vunpack.c.l.b16 %v354
        %v501 = vunpack.c.l.b16 %v355
        %v502 = vunpack.c.h.b16 %v355
        %v503 = vunpack.c.l.b16 %v356
        %v504 = vunpack.c.l.b16 %v357
        %v505 = vunpack.c.h.b16 %v357
        %v506 = vunpack.c.l.b16 %v358
        %v507 = vunpack.c.l.b16 %v359
        %v508 = vunpack.c.h.b16 %v359
        %v509 = vunpack.c.l.b16 %v360
        %v510 = vunpack.c.l.b16 %v361
        %v511 = vunpack.c.h.b16 %v361
        %v512 = vunpack.c.l.b16 %v362
        %v513 = vunpack.c.l.b16 %v363
        %v514 = vunpack.c.h.b16 %v363
        %v515 = vunpack.c.l.b16 %v364
        %v516 = vunpack.c.l.b16 %v365
        %v517 = vunpack.c.h.b16 %v365
        %v518 = vunpack.c.l.b16 %v366
        %v519 = vunpack.c.l.b16 %v367
        %v520 = vunpack.c.h.b16 %v367
        %v521 = vunpack.c.l.b16 %v368
        %v522 = vunpack.c.l.b16 %v369
        %v523 = vunpack.c.h.b16 %v369
        %v524 = vunpack.c.l.b16 %v370
        %v525 = vunpack.c.l.b16 %v371
        %v526 = vunpack.c.h.b16 %v371
        %v527 = vunpack.c.l.b16 %v372
        %v528 = vunpack.c.l.b16 %v373
        %v529 = vunpack.c.h.b16 %v373
        %v530 = vunpack.c.l.b16 %v374
        %v531 = vunpack.c.l.b16 %v375
        %v532 = vunpack.c.h.b16 %v375
        %v533 = vunpack.c.l.b16 %v376
        %v534 = vunpack.c.l.b16 %v377
        %v535 = vunpack.c.h.b16 %v377
        %v536 = vunpack.c.l.b16 %v378
        %v537 = vunpack.c.l.b16 %v379
        %v538 = vunpack.c.h.b16 %v379
        %v539 = vunpack.c.l.b16 %v380
        %v540 = vunpack.c.l.b16 %v381
        %v541 = vunpack.c.h.b16 %v381
        %v542 = vunpack.c.l.b16 %v382
        %v543 = vunpack.c.l.b16 %v383
        %v544 = vunpack.c.h.b16 %v383
        %v545 = vunpack.c.l.b16 %v384
        %v546 = vunpack.c.l.b16 %v385
        %v547 = vunpack.c.h.b16 %v385
        %v548 = vunpack.c.l.b16 %v386
        %v549 = vunpack.c.l.b16 %v387
        %v550 = vunpack.c.h.b16 %v387
        %v551 = vunpack.c.l.b16 %v388
        %v552 = vunpack.c.l.b16 %v389
        %v553 = vunpack.c.h.b16 %v389
        %v554 = vunpack.c.l.b16 %v390
        %v555 = vunpack.c.l.b16 %v391
        %v556 = vunpack.c.h.b16 %v391
        %v557 = vunpack.c.l.b16 %v392
        %v558 = vunpack.c.l.b16 %v393
        %v559 = vunpack.c.h.b16 %v393
        %v560 = vunpack.c.l.b16 %v394
        %v561 = vunpack.c.l.b16 %v395
        %v562 = vunpack.c.h.b16 %v395
        %v563 = vunpack.c.l.b16 %v396
        %v564 = vunpack.c.l.b16 %v397
        %v565 = vunpack.c.h.b16 %v397
        %v566 = vunpack.c.l.b16 %v398
        %v567 = vunpack.c.l.b16 %v399
        %v568 = vunpack.c.h.b16 %v399
        %v569 = vunpack.c.l.b16 %v400
        %v570 = vunpack.c.l.b16 %v401
        %v571 = vunpack.c.h.b16 %v401
        %v572 = vunpack.c.l.b16 %v402
        %v573 = vpack.c.b16 %v480, %v477
        %v574 = vpack.c.b16 %v481, %v478
        %v575 = vpack.c.b16 %v482, %v479
        %v576 = vpack.c.b16 %v486, %v483
        %v577 = vpack.c.b16 %v487, %v484
        %v578 = vpack.c.b16 %v488, %v485
        %v579 = vpack.c.b16 %v492, %v489
        %v580 = vpack.c.b16 %v493, %v490
        %v581 = vpack.c.b16 %v494, %v491
        %v582 = vpack.c.b16 %v498, %v495
        %v583 = vpack.c.b16 %v499, %v496
        %v584 = vpack.c.b16 %v500, %v497
        %v585 = vpack.c.b16 %v504, %v501
        %v586 = vpack.c.b16 %v505, %v502
        %v587 = vpack.c.b16 %v506, %v503
        %v588 = vpack.c.b16 %v510, %v507
        %v589 = vpack.c.b16 %v511, %v508
        %v590 = vpack.c.b16 %v512, %v509
        %v591 = vpack.c.b16 %v516, %v513
        %v592 = vpack.c.b16 %v517, %v514
        %v593 = vpack.c.b16 %v518, %v515
        %v594 = vpack.c.b16 %v522, %v519
        %v595 = vpack.c.b16 %v523, %v520
        %v596 = vpack.c.b16 %v524, %v521
        %v597 = vpack.c.b16 %v528, %v525
        %v598 = vpack.c.b16 %v529, %v526
        %v599 = vpack.c.b16 %v530, %v527
        %v600 = vpack.c.b16 %v534, %v531
        %v601 = vpack.c.b16 %v535, %v532
        %v602 = vpack.c.b16 %v536, %v533
        %v603 = vpack.c.b16 %v540, %v537
        %v604 = vpack.c.b16 %v541, %v538
        %v605 = vpack.c.b16 %v542, %v539
        %v606 = vpack.c.b16 %v546, %v543
        %v607 = vpack.c.b16 %v547, %v544
        %v608 = vpack.c.b16 %v548, %v545
        %v609 = vpack.c.b16 %v552, %v549
        %v610 = vpack.c.b16 %v553, %v550
        %v611 = vpack.c.b16 %v554, %v551
        %v612 = vpack.c.b16 %v558, %v555
        %v613 = vpack.c.b16 %v559, %v556
        %v614 = vpack.c.b16 %v560, %v557
        %v615 = vpack.c.b16 %v564, %v561
        %v616 = vpack.c.b16 %v565, %v562
        %v617 = vpack.c.b16 %v566, %v563
        %v618 = vpack.c.b16 %v570, %v567
        %v619 = vpack.c.b16 %v571, %v568
        %v620 = vpack.c.b16 %v572, %v569
        %669 = vmatprep.subr.bf16.mxu0 %v574
        %670 = vmatpush1.bf16.msra.mxu0 %v573
        %671 = vmatprep.subr.bf16.mxu0 %v577
        %672 = vmatpush1.bf16.msra.mxu0 %v576
        %673 = vmatprep.subr.bf16.mxu0 %v580
        %674 = vmatpush1.bf16.msra.mxu0 %v579
        %675 = vmatprep.subr.bf16.mxu0 %v583
        %676 = vmatpush1.bf16.msra.mxu0 %v582
        %677 = vmatprep.subr.bf16.mxu0 %v586
        %678 = vmatpush1.bf16.msra.mxu0 %v585
        %679 = vmatprep.subr.bf16.mxu0 %v589
        %680 = vmatpush1.bf16.msra.mxu0 %v588
        %681 = vmatprep.subr.bf16.mxu0 %v592
        %682 = vmatpush1.bf16.msra.mxu0 %v591
        %683 = vmatprep.subr.bf16.mxu0 %v595
        %684 = vmatpush1.bf16.msra.mxu0 %v594
        %685 = vmatprep.subr.bf16.mxu0 %v598
        %686 = vmatpush1.bf16.msra.mxu0 %v597
        %687 = vmatprep.subr.bf16.mxu0 %v601
        %688 = vmatpush1.bf16.msra.mxu0 %v600
        %689 = vmatprep.subr.bf16.mxu0 %v604
        %690 = vmatpush1.bf16.msra.mxu0 %v603
        %691 = vmatprep.subr.bf16.mxu0 %v607
        %692 = vmatpush1.bf16.msra.mxu0 %v606
        %693 = vmatprep.subr.bf16.mxu0 %v610
        %694 = vmatpush1.bf16.msra.mxu0 %v609
        %695 = vmatprep.subr.bf16.mxu0 %v613
        %696 = vmatpush1.bf16.msra.mxu0 %v612
        %697 = vmatprep.subr.bf16.mxu0 %v616
        %698 = vmatpush1.bf16.msra.mxu0 %v615
        %699 = vmatprep.subr.bf16.mxu0 %v619
        %700 = vmatpush1.bf16.msra.mxu0 %v618
        %701 = vmatprep.mubr.bf16.mxu0 %v410
        %702 = vmatmul.mubr.bf16.gmra.mrb[0].mxu0 %v409
        %v703 = vpop.f32.mrb[0].mxu0
        %v704 = vadd.f32 0.0, %v703
        %v705 = vpop.f32.mrb[0].mxu0
        %v706 = vadd.f32 0.0, %v705
        %v707 = vpop.f32.mrb[0].mxu0
        %v708 = vadd.f32 0.0, %v707
        %v709 = vpop.f32.mrb[0].mxu0
        %v710 = vadd.f32 0.0, %v709
        %711 = vdwg.mxu0
        %712 = vmatprep.subr.bf16.mxu0 0
        %713 = vmatpush1.bf16.msra.mxu0 %v575
        %714 = vmatprep.subr.bf16.mxu0 0
        %715 = vmatpush1.bf16.msra.mxu0 %v578
        %716 = vmatprep.subr.bf16.mxu0 0
        %717 = vmatpush1.bf16.msra.mxu0 %v581
        %718 = vmatprep.subr.bf16.mxu0 0
        %719 = vmatpush1.bf16.msra.mxu0 %v584
        %720 = vmatprep.subr.bf16.mxu0 0
        %721 = vmatpush1.bf16.msra.mxu0 %v587
        %722 = vmatprep.subr.bf16.mxu0 0
        %723 = vmatpush1.bf16.msra.mxu0 %v590
        %724 = vmatprep.subr.bf16.mxu0 0
        %725 = vmatpush1.bf16.msra.mxu0 %v593
        %726 = vmatprep.subr.bf16.mxu0 0
        %727 = vmatpush1.bf16.msra.mxu0 %v596
        %728 = vmatprep.subr.bf16.mxu0 0
        %729 = vmatpush1.bf16.msra.mxu0 %v599
        %730 = vmatprep.subr.bf16.mxu0 0
        %731 = vmatpush1.bf16.msra.mxu0 %v602
        %732 = vmatprep.subr.bf16.mxu0 0
        %733 = vmatpush1.bf16.msra.mxu0 %v605
        %734 = vmatprep.subr.bf16.mxu0 0
        %735 = vmatpush1.bf16.msra.mxu0 %v608
        %736 = vmatprep.subr.bf16.mxu0 0
        %737 = vmatpush1.bf16.msra.mxu0 %v611
        %738 = vmatprep.subr.bf16.mxu0 0
        %739 = vmatpush1.bf16.msra.mxu0 %v614
        %740 = vmatprep.subr.bf16.mxu0 0
        %741 = vmatpush1.bf16.msra.mxu0 %v617
        %742 = vmatprep.subr.bf16.mxu0 0
        %743 = vmatpush1.bf16.msra.mxu0 %v620
        %744 = vmatprep.mubr.bf16.mxu0 %v410
        %745 = vmatmul.mubr.bf16.gmra.mrb[0].mxu0 %v409
        %v746 = vpop.f32.mrb[0].mxu0
        %v747 = vadd.f32 0.0, %v746
        %v748 = vpop.f32.mrb[0].mxu0
        %v749 = vpop.f32.mrb[0].mxu0
        %v750 = vadd.f32 0.0, %v749
        %v751 = vpop.f32.mrb[0].mxu0
        %752 = vdwg.mxu0
        %v753 = vld [vmem:[%s272] sm:$0xff]
        %v754 = vld [vmem:[%s272 + $0x8] sm:$0xf]
        %v755 = vld [vmem:[%s272 + $0xc] sm:$0xff]
        %v756 = vld [vmem:[%s272 + $0x14] sm:$0xf]
        %v757 = vld [vmem:[%s272 + $0x18] sm:$0xff]
        %v758 = vld [vmem:[%s272 + $0x20] sm:$0xf]
        %v759 = vld [vmem:[%s272 + $0x24] sm:$0xff]
        %v760 = vld [vmem:[%s272 + $0x2c] sm:$0xf]
        %v761 = vld [vmem:[%s272 + $0x30] sm:$0xff]
        %v762 = vld [vmem:[%s272 + $0x38] sm:$0xf]
        %v763 = vld [vmem:[%s272 + $0x3c] sm:$0xff]
        %v764 = vld [vmem:[%s272 + $0x44] sm:$0xf]
        %v765 = vld [vmem:[%s272 + $0x48] sm:$0xff]
        %v766 = vld [vmem:[%s272 + $0x50] sm:$0xf]
        %v767 = vld [vmem:[%s272 + $0x54] sm:$0xff]
        %v768 = vld [vmem:[%s272 + $0x5c] sm:$0xf]
        %v769 = vld [vmem:[%s272 + $0x60] sm:$0xff]
        %v770 = vld [vmem:[%s272 + $0x68] sm:$0xf]
        %v771 = vld [vmem:[%s272 + $0x6c] sm:$0xff]
        %v772 = vld [vmem:[%s272 + $0x74] sm:$0xf]
        %v773 = vld [vmem:[%s272 + $0x78] sm:$0xff]
        %v774 = vld [vmem:[%s272 + $0x80] sm:$0xf]
        %v775 = vld [vmem:[%s272 + $0x84] sm:$0xff]
        %v776 = vld [vmem:[%s272 + $0x8c] sm:$0xf]
        %v777 = vld [vmem:[%s272 + $0x90] sm:$0xff]
        %v778 = vld [vmem:[%s272 + $0x98] sm:$0xf]
        %v779 = vld [vmem:[%s272 + $0x9c] sm:$0xff]
        %v780 = vld [vmem:[%s272 + $0xa4] sm:$0xf]
        %v781 = vld [vmem:[%s272 + $0xa8] sm:$0xff]
        %v782 = vld [vmem:[%s272 + $0xb0] sm:$0xf]
        %v783 = vld [vmem:[%s272 + $0xb4] sm:$0xff]
        %v784 = vld [vmem:[%s272 + $0xbc] sm:$0xf]
        %v785 = vld [vmem:[%s272 + $0xc0] sm:$0xff]
        %v786 = vld [vmem:[%s272 + $0xc8] sm:$0xf]
        %v787 = vld [vmem:[%s272 + $0xcc] sm:$0xff]
        %v788 = vld [vmem:[%s272 + $0xd4] sm:$0xf]
        %v789 = vld [vmem:[%s272 + $0xd8] sm:$0xff]
        %v790 = vld [vmem:[%s272 + $0xe0] sm:$0xf]
        %v791 = vld [vmem:[%s272 + $0xe4] sm:$0xff]
        %v792 = vld [vmem:[%s272 + $0xec] sm:$0xf]
        %v793 = vld [vmem:[%s272 + $0xf0] sm:$0xff]
        %v794 = vld [vmem:[%s272 + $0xf8] sm:$0xf]
        %v795 = vld [vmem:[%s272 + $0xfc] sm:$0xff]
        %v796 = vld [vmem:[%s272 + $0x104] sm:$0xf]
        %v797 = vld [vmem:[%s272 + $0x108] sm:$0xff]
        %v798 = vld [vmem:[%s272 + $0x110] sm:$0xf]
        %v799 = vld [vmem:[%s272 + $0x114] sm:$0xff]
        %v800 = vld [vmem:[%s272 + $0x11c] sm:$0xf]
        %v801 = vld [vmem:[%s272 + $0x120] sm:$0xff]
        %v802 = vld [vmem:[%s272 + $0x128] sm:$0xf]
        %v803 = vld [vmem:[%s272 + $0x12c] sm:$0xff]
        %v804 = vld [vmem:[%s272 + $0x134] sm:$0xf]
        %v805 = vld [vmem:[%s272 + $0x138] sm:$0xff]
        %v806 = vld [vmem:[%s272 + $0x140] sm:$0xf]
        %v807 = vld [vmem:[%s272 + $0x144] sm:$0xff]
        %v808 = vld [vmem:[%s272 + $0x14c] sm:$0xf]
        %v809 = vld [vmem:[%s272 + $0x150] sm:$0xff]
        %v810 = vld [vmem:[%s272 + $0x158] sm:$0xf]
        %v811 = vld [vmem:[%s272 + $0x15c] sm:$0xff]
        %v812 = vld [vmem:[%s272 + $0x164] sm:$0xf]
        %v813 = vld [vmem:[%s272 + $0x168] sm:$0xff]
        %v814 = vld [vmem:[%s272 + $0x170] sm:$0xf]
        %v815 = vld [vmem:[%s272 + $0x174] sm:$0xff]
        %v816 = vld [vmem:[%s272 + $0x17c] sm:$0xf]
        %v881 = vunpack.c.l.b16 %v753
        %v882 = vunpack.c.h.b16 %v753
        %v883 = vunpack.c.l.b16 %v754
        %v884 = vunpack.c.l.b16 %v755
        %v885 = vunpack.c.h.b16 %v755
        %v886 = vunpack.c.l.b16 %v756
        %v887 = vunpack.c.l.b16 %v757
        %v888 = vunpack.c.h.b16 %v757
        %v889 = vunpack.c.l.b16 %v758
        %v890 = vunpack.c.l.b16 %v759
        %v891 = vunpack.c.h.b16 %v759
        %v892 = vunpack.c.l.b16 %v760
        %v893 = vunpack.c.l.b16 %v761
        %v894 = vunpack.c.h.b16 %v761
        %v895 = vunpack.c.l.b16 %v762
        %v896 = vunpack.c.l.b16 %v763
        %v897 = vunpack.c.h.b16 %v763
        %v898 = vunpack.c.l.b16 %v764
        %v899 = vunpack.c.l.b16 %v765
        %v900 = vunpack.c.h.b16 %v765
        %v901 = vunpack.c.l.b16 %v766
        %v902 = vunpack.c.l.b16 %v767
        %v903 = vunpack.c.h.b16 %v767
        %v904 = vunpack.c.l.b16 %v768
        %v905 = vunpack.c.l.b16 %v769
        %v906 = vunpack.c.h.b16 %v769
        %v907 = vunpack.c.l.b16 %v770
        %v908 = vunpack.c.l.b16 %v771
        %v909 = vunpack.c.h.b16 %v771
        %v910 = vunpack.c.l.b16 %v772
        %v911 = vunpack.c.l.b16 %v773
        %v912 = vunpack.c.h.b16 %v773
        %v913 = vunpack.c.l.b16 %v774
        %v914 = vunpack.c.l.b16 %v775
        %v915 = vunpack.c.h.b16 %v775
        %v916 = vunpack.c.l.b16 %v776
        %v917 = vunpack.c.l.b16 %v777
        %v918 = vunpack.c.h.b16 %v777
        %v919 = vunpack.c.l.b16 %v778
        %v920 = vunpack.c.l.b16 %v779
        %v921 = vunpack.c.h.b16 %v779
        %v922 = vunpack.c.l.b16 %v780
        %v923 = vunpack.c.l.b16 %v781
        %v924 = vunpack.c.h.b16 %v781
        %v925 = vunpack.c.l.b16 %v782
        %v926 = vunpack.c.l.b16 %v783
        %v927 = vunpack.c.h.b16 %v783
        %v928 = vunpack.c.l.b16 %v784
        %v929 = vunpack.c.l.b16 %v785
        %v930 = vunpack.c.h.b16 %v785
        %v931 = vunpack.c.l.b16 %v786
        %v932 = vunpack.c.l.b16 %v787
        %v933 = vunpack.c.h.b16 %v787
        %v934 = vunpack.c.l.b16 %v788
        %v935 = vunpack.c.l.b16 %v789
        %v936 = vunpack.c.h.b16 %v789
        %v937 = vunpack.c.l.b16 %v790
        %v938 = vunpack.c.l.b16 %v791
        %v939 = vunpack.c.h.b16 %v791
        %v940 = vunpack.c.l.b16 %v792
        %v941 = vunpack.c.l.b16 %v793
        %v942 = vunpack.c.h.b16 %v793
        %v943 = vunpack.c.l.b16 %v794
        %v944 = vunpack.c.l.b16 %v795
        %v945 = vunpack.c.h.b16 %v795
        %v946 = vunpack.c.l.b16 %v796
        %v947 = vunpack.c.l.b16 %v797
        %v948 = vunpack.c.h.b16 %v797
        %v949 = vunpack.c.l.b16 %v798
        %v950 = vunpack.c.l.b16 %v799
        %v951 = vunpack.c.h.b16 %v799
        %v952 = vunpack.c.l.b16 %v800
        %v953 = vunpack.c.l.b16 %v801
        %v954 = vunpack.c.h.b16 %v801
        %v955 = vunpack.c.l.b16 %v802
        %v956 = vunpack.c.l.b16 %v803
        %v957 = vunpack.c.h.b16 %v803
        %v958 = vunpack.c.l.b16 %v804
        %v959 = vunpack.c.l.b16 %v805
        %v960 = vunpack.c.h.b16 %v805
        %v961 = vunpack.c.l.b16 %v806
        %v962 = vunpack.c.l.b16 %v807
        %v963 = vunpack.c.h.b16 %v807
        %v964 = vunpack.c.l.b16 %v808
        %v965 = vunpack.c.l.b16 %v809
        %v966 = vunpack.c.h.b16 %v809
        %v967 = vunpack.c.l.b16 %v810
        %v968 = vunpack.c.l.b16 %v811
        %v969 = vunpack.c.h.b16 %v811
        %v970 = vunpack.c.l.b16 %v812
        %v971 = vunpack.c.l.b16 %v813
        %v972 = vunpack.c.h.b16 %v813
        %v973 = vunpack.c.l.b16 %v814
        %v974 = vunpack.c.l.b16 %v815
        %v975 = vunpack.c.h.b16 %v815
        %v976 = vunpack.c.l.b16 %v816
        %v977 = vpack.c.b16 %v884, %v881
        %v978 = vpack.c.b16 %v885, %v882
        %v979 = vpack.c.b16 %v886, %v883
        %v980 = vpack.c.b16 %v890, %v887
        %v981 = vpack.c.b16 %v891, %v888
        %v982 = vpack.c.b16 %v892, %v889
        %v983 = vpack.c.b16 %v896, %v893
        %v984 = vpack.c.b16 %v897, %v894
        %v985 = vpack.c.b16 %v898, %v895
        %v986 = vpack.c.b16 %v902, %v899
        %v987 = vpack.c.b16 %v903, %v900
        %v988 = vpack.c.b16 %v904, %v901
        %v989 = vpack.c.b16 %v908, %v905
        %v990 = vpack.c.b16 %v909, %v906
        %v991 = vpack.c.b16 %v910, %v907
        %v992 = vpack.c.b16 %v914, %v911
        %v993 = vpack.c.b16 %v915, %v912
        %v994 = vpack.c.b16 %v916, %v913
        %v995 = vpack.c.b16 %v920, %v917
        %v996 = vpack.c.b16 %v921, %v918
        %v997 = vpack.c.b16 %v922, %v919
        %v998 = vpack.c.b16 %v926, %v923
        %v999 = vpack.c.b16 %v927, %v924
        %v1000 = vpack.c.b16 %v928, %v925
        %v1001 = vpack.c.b16 %v932, %v929
        %v1002 = vpack.c.b16 %v933, %v930
        %v1003 = vpack.c.b16 %v934, %v931
        %v1004 = vpack.c.b16 %v938, %v935
        %v1005 = vpack.c.b16 %v939, %v936
        %v1006 = vpack.c.b16 %v940, %v937
        %v1007 = vpack.c.b16 %v944, %v941
        %v1008 = vpack.c.b16 %v945, %v942
        %v1009 = vpack.c.b16 %v946, %v943
        %v1010 = vpack.c.b16 %v950, %v947
        %v1011 = vpack.c.b16 %v951, %v948
        %v1012 = vpack.c.b16 %v952, %v949
        %v1013 = vpack.c.b16 %v956, %v953
        %v1014 = vpack.c.b16 %v957, %v954
        %v1015 = vpack.c.b16 %v958, %v955
        %v1016 = vpack.c.b16 %v962, %v959
        %v1017 = vpack.c.b16 %v963, %v960
        %v1018 = vpack.c.b16 %v964, %v961
        %v1019 = vpack.c.b16 %v968, %v965
        %v1020 = vpack.c.b16 %v969, %v966
        %v1021 = vpack.c.b16 %v970, %v967
        %v1022 = vpack.c.b16 %v974, %v971
        %v1023 = vpack.c.b16 %v975, %v972
        %v1024 = vpack.c.b16 %v976, %v973
        %1073 = vmatprep.subr.bf16.mxu0 %v978
        %1074 = vmatpush1.bf16.msra.mxu0 %v977
        %1075 = vmatprep.subr.bf16.mxu0 %v981
        %1076 = vmatpush1.bf16.msra.mxu0 %v980
        %1077 = vmatprep.subr.bf16.mxu0 %v984
        %1078 = vmatpush1.bf16.msra.mxu0 %v983
        %1079 = vmatprep.subr.bf16.mxu0 %v987
        %1080 = vmatpush1.bf16.msra.mxu0 %v986
        %1081 = vmatprep.subr.bf16.mxu0 %v990
        %1082 = vmatpush1.bf16.msra.mxu0 %v989
        %1083 = vmatprep.subr.bf16.mxu0 %v993
        %1084 = vmatpush1.bf16.msra.mxu0 %v992
        %1085 = vmatprep.subr.bf16.mxu0 %v996
        %1086 = vmatpush1.bf16.msra.mxu0 %v995
        %1087 = vmatprep.subr.bf16.mxu0 %v999
        %1088 = vmatpush1.bf16.msra.mxu0 %v998
        %1089 = vmatprep.subr.bf16.mxu0 %v1002
        %1090 = vmatpush1.bf16.msra.mxu0 %v1001
        %1091 = vmatprep.subr.bf16.mxu0 %v1005
        %1092 = vmatpush1.bf16.msra.mxu0 %v1004
        %1093 = vmatprep.subr.bf16.mxu0 %v1008
        %1094 = vmatpush1.bf16.msra.mxu0 %v1007
        %1095 = vmatprep.subr.bf16.mxu0 %v1011
        %1096 = vmatpush1.bf16.msra.mxu0 %v1010
        %1097 = vmatprep.subr.bf16.mxu0 %v1014
        %1098 = vmatpush1.bf16.msra.mxu0 %v1013
        %1099 = vmatprep.subr.bf16.mxu0 %v1017
        %1100 = vmatpush1.bf16.msra.mxu0 %v1016
        %1101 = vmatprep.subr.bf16.mxu0 %v1020
        %1102 = vmatpush1.bf16.msra.mxu0 %v1019
        %1103 = vmatprep.subr.bf16.mxu0 %v1023
        %1104 = vmatpush1.bf16.msra.mxu0 %v1022
        %1105 = vmatprep.mubr.bf16.mxu0 %v410
        %1106 = vmatmul.mubr.bf16.gmra.mrb[0].mxu0 %v409
        %v1107 = vpop.f32.mrb[0].mxu0
        %v1108 = vadd.f32 0.0, %v1107
        %v1109 = vpop.f32.mrb[0].mxu0
        %v1110 = vadd.f32 0.0, %v1109
        %v1111 = vpop.f32.mrb[0].mxu0
        %v1112 = vadd.f32 0.0, %v1111
        %v1113 = vpop.f32.mrb[0].mxu0
        %v1114 = vadd.f32 0.0, %v1113
        %1115 = vdwg.mxu0
        %1116 = vmatprep.subr.bf16.mxu0 0
        %1117 = vmatpush1.bf16.msra.mxu0 %v979
        %1118 = vmatprep.subr.bf16.mxu0 0
        %1119 = vmatpush1.bf16.msra.mxu0 %v982
        %1120 = vmatprep.subr.bf16.mxu0 0
        %1121 = vmatpush1.bf16.msra.mxu0 %v985
        %1122 = vmatprep.subr.bf16.mxu0 0
        %1123 = vmatpush1.bf16.msra.mxu0 %v988
        %1124 = vmatprep.subr.bf16.mxu0 0
        %1125 = vmatpush1.bf16.msra.mxu0 %v991
        %1126 = vmatprep.subr.bf16.mxu0 0
        %1127 = vmatpush1.bf16.msra.mxu0 %v994
        %1128 = vmatprep.subr.bf16.mxu0 0
        %1129 = vmatpush1.bf16.msra.mxu0 %v997
        %1130 = vmatprep.subr.bf16.mxu0 0
        %1131 = vmatpush1.bf16.msra.mxu0 %v1000
        %1132 = vmatprep.subr.bf16.mxu0 0
        %1133 = vmatpush1.bf16.msra.mxu0 %v1003
        %1134 = vmatprep.subr.bf16.mxu0 0
        %1135 = vmatpush1.bf16.msra.mxu0 %v1006
        %1136 = vmatprep.subr.bf16.mxu0 0
        %1137 = vmatpush1.bf16.msra.mxu0 %v1009
        %1138 = vmatprep.subr.bf16.mxu0 0
        %1139 = vmatpush1.bf16.msra.mxu0 %v1012
        %1140 = vmatprep.subr.bf16.mxu0 0
        %1141 = vmatpush1.bf16.msra.mxu0 %v1015
        %1142 = vmatprep.subr.bf16.mxu0 0
        %1143 = vmatpush1.bf16.msra.mxu0 %v1018
        %1144 = vmatprep.subr.bf16.mxu0 0
        %1145 = vmatpush1.bf16.msra.mxu0 %v1021
        %1146 = vmatprep.subr.bf16.mxu0 0
        %1147 = vmatpush1.bf16.msra.mxu0 %v1024
        %1148 = vmatprep.mubr.bf16.mxu0 %v410
        %1149 = vmatmul.mubr.bf16.gmra.mrb[0].mxu0 %v409
        %v1150 = vpop.f32.mrb[0].mxu0
        %v1151 = vadd.f32 0.0, %v1150
        %v1152 = vpop.f32.mrb[0].mxu0
        %v1153 = vpop.f32.mrb[0].mxu0
        %v1154 = vadd.f32 0.0, %v1153
        %v1155 = vpop.f32.mrb[0].mxu0
        %1156 = vdwg.mxu0
        %v1157 = vxor.u32 %v704, 2147483648
        %v1158 = vxor.u32 %v706, 2147483648
        %v1159 = vxor.u32 %v747, 2147483648
        %v1160 = vxor.u32 %v708, 2147483648
        %v1161 = vxor.u32 %v710, 2147483648
        %v1162 = vxor.u32 %v750, 2147483648
        %v1163 = vmul.f32 %v1157, 1.442695
        %v1164 = vpow.pop %v1163
        %v1165 = vmul.f32 %v1158, 1.442695
        %v1166 = vpow.pop %v1165
        %v1167 = vmul.f32 %v1159, 1.442695
        %v1168 = vpow.pop %v1167
        %v1169 = vmul.f32 %v1160, 1.442695
        %v1170 = vpow.pop %v1169
        %v1171 = vmul.f32 %v1161, 1.442695
        %v1172 = vpow.pop %v1171
        %v1173 = vmul.f32 %v1162, 1.442695
        %v1174 = vpow.pop %v1173
        %v1175 = vadd.f32 %v1164, 1.0
        %v1176 = vadd.f32 %v1166, 1.0
        %v1177 = vadd.f32 %v1168, 1.0
        %v1178 = vadd.f32 %v1170, 1.0
        %v1179 = vadd.f32 %v1172, 1.0
        %v1180 = vadd.f32 %v1174, 1.0
        %v1181 = vrcp.pop %v1175
        %v1182 = vmul.f32 1.0, %v1181
        %v1183 = vrcp.pop %v1176
        %v1184 = vmul.f32 1.0, %v1183
        %v1185 = vrcp.pop %v1177
        %v1186 = vmul.f32 1.0, %v1185
        %v1187 = vrcp.pop %v1178
        %v1188 = vmul.f32 1.0, %v1187
        %v1189 = vrcp.pop %v1179
        %v1190 = vmul.f32 1.0, %v1189
        %v1191 = vrcp.pop %v1180
        %v1192 = vmul.f32 1.0, %v1191
        %v1193 = vmul.f32 %v704, %v1182
        %v1194 = vmul.f32 %v706, %v1184
        %v1195 = vmul.f32 %v747, %v1186
        %v1196 = vmul.f32 %v708, %v1188
        %v1197 = vmul.f32 %v710, %v1190
        %v1198 = vmul.f32 %v750, %v1192
        %v1199 = vmul.f32 %v1193, %v1108
        %v1200 = vmul.f32 %v1194, %v1110
        %v1201 = vmul.f32 %v1195, %v1151
        %v1202 = vmul.f32 %v1196, %v1112
        %v1203 = vmul.f32 %v1197, %v1114
        %v1204 = vmul.f32 %v1198, %v1154
        %v1205 = vld [vmem:[#allocation8] sm:$0xff]
        %v1206 = vld [vmem:[#allocation8 + $0x8] sm:$0xff]
        %v1207 = vld [vmem:[#allocation8 + $0x10] sm:$0xff]
        %v1208 = vld [vmem:[#allocation8 + $0x18] sm:$0xff]
        %v1209 = vpack.c.bf16 %v1202, %v1199
        %v1210 = vpack.c.bf16 %v1203, %v1200
        %v1211 = vpack.c.bf16 %v1204, %v1201
        %v1212 = vld [vmem:[%s281] sm:$0xff]
        %v1213 = vld [vmem:[%s281 + $0x8] sm:$0xff]
        %v1214 = vld [vmem:[%s281 + $0x10] sm:$0xff]
        %v1215 = vld [vmem:[%s281 + $0x18] sm:$0xff]
        %v1216 = vld [vmem:[%s281 + $0x20] sm:$0xff]
        %v1217 = vld [vmem:[%s281 + $0x28] sm:$0xff]
        %v1218 = vld [vmem:[%s281 + $0x30] sm:$0xff]
        %v1219 = vld [vmem:[%s281 + $0x38] sm:$0xff]
        %v1220 = vld [vmem:[%s281 + $0x40] sm:$0xff]
        %v1221 = vld [vmem:[%s281 + $0x48] sm:$0xff]
        %v1222 = vld [vmem:[%s281 + $0x50] sm:$0xff]
        %v1223 = vld [vmem:[%s281 + $0x58] sm:$0xff]
        %v1224 = vld [vmem:[%s281 + $0x60] sm:$0xff]
        %v1225 = vld [vmem:[%s281 + $0x68] sm:$0xff]
        %v1226 = vld [vmem:[%s281 + $0x70] sm:$0xff]
        %v1227 = vld [vmem:[%s281 + $0x78] sm:$0xff]
        %v1228 = vld [vmem:[%s281 + $0x80] sm:$0xff]
        %v1229 = vld [vmem:[%s281 + $0x88] sm:$0xff]
        %v1230 = vld [vmem:[%s281 + $0x90] sm:$0xff]
        %v1231 = vld [vmem:[%s281 + $0x98] sm:$0xff]
        %v1232 = vld [vmem:[%s281 + $0xa0] sm:$0xff]
        %v1233 = vld [vmem:[%s281 + $0xa8] sm:$0xff]
        %v1234 = vld [vmem:[%s281 + $0xb0] sm:$0xff]
        %v1235 = vld [vmem:[%s281 + $0xb8] sm:$0xff]
        %v1236 = vld [vmem:[%s281 + $0xc0] sm:$0xff]
        %v1237 = vld [vmem:[%s281 + $0xc8] sm:$0xff]
        %v1238 = vld [vmem:[%s281 + $0xd0] sm:$0xff]
        %v1239 = vld [vmem:[%s281 + $0xd8] sm:$0xff]
        %v1240 = vld [vmem:[%s281 + $0xe0] sm:$0xff]
        %v1241 = vld [vmem:[%s281 + $0xe8] sm:$0xff]
        %v1242 = vld [vmem:[%s281 + $0xf0] sm:$0xff]
        %v1243 = vld [vmem:[%s281 + $0xf8] sm:$0xff]
        %v1244 = vld [vmem:[%s281 + $0x100] sm:$0xff]
        %v1245 = vld [vmem:[%s281 + $0x108] sm:$0xff]
        %v1246 = vld [vmem:[%s281 + $0x110] sm:$0xff]
        %v1247 = vld [vmem:[%s281 + $0x118] sm:$0xff]
        %v1248 = vld [vmem:[%s281 + $0x120] sm:$0xff]
        %v1249 = vld [vmem:[%s281 + $0x128] sm:$0xff]
        %v1250 = vld [vmem:[%s281 + $0x130] sm:$0xff]
        %v1251 = vld [vmem:[%s281 + $0x138] sm:$0xff]
        %v1252 = vld [vmem:[%s281 + $0x140] sm:$0xff]
        %v1253 = vld [vmem:[%s281 + $0x148] sm:$0xff]
        %v1254 = vld [vmem:[%s281 + $0x150] sm:$0xff]
        %v1255 = vld [vmem:[%s281 + $0x158] sm:$0xff]
        %v1256 = vld [vmem:[%s281 + $0x160] sm:$0xff]
        %v1257 = vld [vmem:[%s281 + $0x168] sm:$0xff]
        %v1258 = vld [vmem:[%s281 + $0x170] sm:$0xff]
        %v1259 = vld [vmem:[%s281 + $0x178] sm:$0xff]
        %v1308 = vunpack.c.l.b16 %v1212
        %v1309 = vunpack.c.h.b16 %v1212
        %v1310 = vunpack.c.l.b16 %v1213
        %v1311 = vunpack.c.h.b16 %v1213
        %v1312 = vunpack.c.l.b16 %v1214
        %v1313 = vunpack.c.h.b16 %v1214
        %v1314 = vunpack.c.l.b16 %v1215
        %v1315 = vunpack.c.h.b16 %v1215
        %v1316 = vunpack.c.l.b16 %v1216
        %v1317 = vunpack.c.h.b16 %v1216
        %v1318 = vunpack.c.l.b16 %v1217
        %v1319 = vunpack.c.h.b16 %v1217
        %v1320 = vunpack.c.l.b16 %v1218
        %v1321 = vunpack.c.h.b16 %v1218
        %v1322 = vunpack.c.l.b16 %v1219
        %v1323 = vunpack.c.h.b16 %v1219
        %v1324 = vunpack.c.l.b16 %v1220
        %v1325 = vunpack.c.h.b16 %v1220
        %v1326 = vunpack.c.l.b16 %v1221
        %v1327 = vunpack.c.h.b16 %v1221
        %v1328 = vunpack.c.l.b16 %v1222
        %v1329 = vunpack.c.h.b16 %v1222
        %v1330 = vunpack.c.l.b16 %v1223
        %v1331 = vunpack.c.h.b16 %v1223
        %v1332 = vunpack.c.l.b16 %v1224
        %v1333 = vunpack.c.h.b16 %v1224
        %v1334 = vunpack.c.l.b16 %v1225
        %v1335 = vunpack.c.h.b16 %v1225
        %v1336 = vunpack.c.l.b16 %v1226
        %v1337 = vunpack.c.h.b16 %v1226
        %v1338 = vunpack.c.l.b16 %v1227
        %v1339 = vunpack.c.h.b16 %v1227
        %v1340 = vunpack.c.l.b16 %v1228
        %v1341 = vunpack.c.h.b16 %v1228
        %v1342 = vunpack.c.l.b16 %v1229
        %v1343 = vunpack.c.h.b16 %v1229
        %v1344 = vunpack.c.l.b16 %v1230
        %v1345 = vunpack.c.h.b16 %v1230
        %v1346 = vunpack.c.l.b16 %v1231
        %v1347 = vunpack.c.h.b16 %v1231
        %v1348 = vunpack.c.l.b16 %v1232
        %v1349 = vunpack.c.h.b16 %v1232
        %v1350 = vunpack.c.l.b16 %v1233
        %v1351 = vunpack.c.h.b16 %v1233
        %v1352 = vunpack.c.l.b16 %v1234
        %v1353 = vunpack.c.h.b16 %v1234
        %v1354 = vunpack.c.l.b16 %v1235
        %v1355 = vunpack.c.h.b16 %v1235
        %v1356 = vunpack.c.l.b16 %v1236
        %v1357 = vunpack.c.h.b16 %v1236
        %v1358 = vunpack.c.l.b16 %v1237
        %v1359 = vunpack.c.h.b16 %v1237
        %v1360 = vunpack.c.l.b16 %v1238
        %v1361 = vunpack.c.h.b16 %v1238
        %v1362 = vunpack.c.l.b16 %v1239
        %v1363 = vunpack.c.h.b16 %v1239
        %v1364 = vunpack.c.l.b16 %v1240
        %v1365 = vunpack.c.h.b16 %v1240
        %v1366 = vunpack.c.l.b16 %v1241
        %v1367 = vunpack.c.h.b16 %v1241
        %v1368 = vunpack.c.l.b16 %v1242
        %v1369 = vunpack.c.h.b16 %v1242
        %v1370 = vunpack.c.l.b16 %v1243
        %v1371 = vunpack.c.h.b16 %v1243
        %v1372 = vunpack.c.l.b16 %v1244
        %v1373 = vunpack.c.h.b16 %v1244
        %v1374 = vunpack.c.l.b16 %v1245
        %v1375 = vunpack.c.h.b16 %v1245
        %v1376 = vunpack.c.l.b16 %v1246
        %v1377 = vunpack.c.h.b16 %v1246
        %v1378 = vunpack.c.l.b16 %v1247
        %v1379 = vunpack.c.h.b16 %v1247
        %v1380 = vunpack.c.l.b16 %v1248
        %v1381 = vunpack.c.h.b16 %v1248
        %v1382 = vunpack.c.l.b16 %v1249
        %v1383 = vunpack.c.h.b16 %v1249
        %v1384 = vunpack.c.l.b16 %v1250
        %v1385 = vunpack.c.h.b16 %v1250
        %v1386 = vunpack.c.l.b16 %v1251
        %v1387 = vunpack.c.h.b16 %v1251
        %v1388 = vunpack.c.l.b16 %v1252
        %v1389 = vunpack.c.h.b16 %v1252
        %v1390 = vunpack.c.l.b16 %v1253
        %v1391 = vunpack.c.h.b16 %v1253
        %v1392 = vunpack.c.l.b16 %v1254
        %v1393 = vunpack.c.h.b16 %v1254
        %v1394 = vunpack.c.l.b16 %v1255
        %v1395 = vunpack.c.h.b16 %v1255
        %v1396 = vunpack.c.l.b16 %v1256
        %v1397 = vunpack.c.h.b16 %v1256
        %v1398 = vunpack.c.l.b16 %v1257
        %v1399 = vunpack.c.h.b16 %v1257
        %v1400 = vunpack.c.l.b16 %v1258
        %v1401 = vunpack.c.h.b16 %v1258
        %v1402 = vunpack.c.l.b16 %v1259
        %v1403 = vunpack.c.h.b16 %v1259
        %v1404 = vpack.c.b16 %v1310, %v1308
        %v1405 = vpack.c.b16 %v1311, %v1309
        %v1406 = vpack.c.b16 %v1314, %v1312
        %v1407 = vpack.c.b16 %v1315, %v1313
        %v1408 = vpack.c.b16 %v1318, %v1316
        %v1409 = vpack.c.b16 %v1319, %v1317
        %v1410 = vpack.c.b16 %v1322, %v1320
        %v1411 = vpack.c.b16 %v1323, %v1321
        %v1412 = vpack.c.b16 %v1326, %v1324
        %v1413 = vpack.c.b16 %v1327, %v1325
        %v1414 = vpack.c.b16 %v1330, %v1328
        %v1415 = vpack.c.b16 %v1331, %v1329
        %v1416 = vpack.c.b16 %v1334, %v1332
        %v1417 = vpack.c.b16 %v1335, %v1333
        %v1418 = vpack.c.b16 %v1338, %v1336
        %v1419 = vpack.c.b16 %v1339, %v1337
        %v1420 = vpack.c.b16 %v1342, %v1340
        %v1421 = vpack.c.b16 %v1343, %v1341
        %v1422 = vpack.c.b16 %v1346, %v1344
        %v1423 = vpack.c.b16 %v1347, %v1345
        %v1424 = vpack.c.b16 %v1350, %v1348
        %v1425 = vpack.c.b16 %v1351, %v1349
        %v1426 = vpack.c.b16 %v1354, %v1352
        %v1427 = vpack.c.b16 %v1355, %v1353
        %v1428 = vpack.c.b16 %v1358, %v1356
        %v1429 = vpack.c.b16 %v1359, %v1357
        %v1430 = vpack.c.b16 %v1362, %v1360
        %v1431 = vpack.c.b16 %v1363, %v1361
        %v1432 = vpack.c.b16 %v1366, %v1364
        %v1433 = vpack.c.b16 %v1367, %v1365
        %v1434 = vpack.c.b16 %v1370, %v1368
        %v1435 = vpack.c.b16 %v1371, %v1369
        %v1436 = vpack.c.b16 %v1374, %v1372
        %v1437 = vpack.c.b16 %v1375, %v1373
        %v1438 = vpack.c.b16 %v1378, %v1376
        %v1439 = vpack.c.b16 %v1379, %v1377
        %v1440 = vpack.c.b16 %v1382, %v1380
        %v1441 = vpack.c.b16 %v1383, %v1381
        %v1442 = vpack.c.b16 %v1386, %v1384
        %v1443 = vpack.c.b16 %v1387, %v1385
        %v1444 = vpack.c.b16 %v1390, %v1388
        %v1445 = vpack.c.b16 %v1391, %v1389
        %v1446 = vpack.c.b16 %v1394, %v1392
        %v1447 = vpack.c.b16 %v1395, %v1393
        %v1448 = vpack.c.b16 %v1398, %v1396
        %v1449 = vpack.c.b16 %v1399, %v1397
        %v1450 = vpack.c.b16 %v1402, %v1400
        %v1451 = vpack.c.b16 %v1403, %v1401
        %1500 = vmatprep.subr.bf16.mxu0 %v1405
        %1501 = vmatpush1.bf16.msra.mxu0 %v1404
        %1502 = vmatprep.subr.bf16.mxu0 %v1407
        %1503 = vmatpush1.bf16.msra.mxu0 %v1406
        %1504 = vmatprep.subr.bf16.mxu0 %v1409
        %1505 = vmatpush1.bf16.msra.mxu0 %v1408
        %1506 = vmatprep.subr.bf16.mxu0 %v1411
        %1507 = vmatpush1.bf16.msra.mxu0 %v1410
        %1508 = vmatprep.subr.bf16.mxu0 %v1413
        %1509 = vmatpush1.bf16.msra.mxu0 %v1412
        %1510 = vmatprep.subr.bf16.mxu0 %v1415
        %1511 = vmatpush1.bf16.msra.mxu0 %v1414
        %1512 = vmatprep.subr.bf16.mxu0 %v1417
        %1513 = vmatpush1.bf16.msra.mxu0 %v1416
        %1514 = vmatprep.subr.bf16.mxu0 %v1419
        %1515 = vmatpush1.bf16.msra.mxu0 %v1418
        %1516 = vmatprep.subr.bf16.mxu0 %v1421
        %1517 = vmatpush1.bf16.msra.mxu0 %v1420
        %1518 = vmatprep.subr.bf16.mxu0 %v1423
        %1519 = vmatpush1.bf16.msra.mxu0 %v1422
        %1520 = vmatprep.subr.bf16.mxu0 %v1425
        %1521 = vmatpush1.bf16.msra.mxu0 %v1424
        %1522 = vmatprep.subr.bf16.mxu0 %v1427
        %1523 = vmatpush1.bf16.msra.mxu0 %v1426
        %1524 = vmatprep.subr.bf16.mxu0 %v1429
        %1525 = vmatpush1.bf16.msra.mxu0 %v1428
        %1526 = vmatprep.subr.bf16.mxu0 %v1431
        %1527 = vmatpush1.bf16.msra.mxu0 %v1430
        %1528 = vmatprep.subr.bf16.mxu0 %v1433
        %1529 = vmatpush1.bf16.msra.mxu0 %v1432
        %1530 = vmatprep.subr.bf16.mxu0 %v1435
        %1531 = vmatpush1.bf16.msra.mxu0 %v1434
        %1532 = vmatprep.mubr.bf16.mxu0 %v1210
        %1533 = vmatmul.mubr.bf16.gmra.mrb[0].mxu0 %v1209
        %v1534 = vpop.f32.mrb[0].mxu0
        %v1535 = vadd.f32 0.0, %v1534
        %v1536 = vpop.f32.mrb[0].mxu0
        %v1537 = vadd.f32 0.0, %v1536
        %v1538 = vpop.f32.mrb[0].mxu0
        %v1539 = vadd.f32 0.0, %v1538
        %v1540 = vpop.f32.mrb[0].mxu0
        %v1541 = vadd.f32 0.0, %v1540
        %1542 = vdwg.mxu0
        %1543 = vmatprep.subr.bf16.mxu0 %v1437
        %1544 = vmatpush1.bf16.msra.mxu0 %v1436
        %1545 = vmatprep.subr.bf16.mxu0 %v1439
        %1546 = vmatpush1.bf16.msra.mxu0 %v1438
        %1547 = vmatprep.subr.bf16.mxu0 %v1441
        %1548 = vmatpush1.bf16.msra.mxu0 %v1440
        %1549 = vmatprep.subr.bf16.mxu0 %v1443
        %1550 = vmatpush1.bf16.msra.mxu0 %v1442
        %1551 = vmatprep.subr.bf16.mxu0 %v1445
        %1552 = vmatpush1.bf16.msra.mxu0 %v1444
        %1553 = vmatprep.subr.bf16.mxu0 %v1447
        %1554 = vmatpush1.bf16.msra.mxu0 %v1446
        %1555 = vmatprep.subr.bf16.mxu0 %v1449
        %1556 = vmatpush1.bf16.msra.mxu0 %v1448
        %1557 = vmatprep.subr.bf16.mxu0 %v1451
        %1558 = vmatpush1.bf16.msra.mxu0 %v1450
        %1559 = vmatprep.subr.bf16.mxu0 0
        %1560 = vmatpush1.bf16.msra.mxu0 0
        %1561 = vmatprep.subr.bf16.mxu0 0
        %1562 = vmatpush1.bf16.msra.mxu0 0
        %1563 = vmatprep.subr.bf16.mxu0 0
        %1564 = vmatpush1.bf16.msra.mxu0 0
        %1565 = vmatprep.subr.bf16.mxu0 0
        %1566 = vmatpush1.bf16.msra.mxu0 0
        %1567 = vmatprep.subr.bf16.mxu0 0
        %1568 = vmatpush1.bf16.msra.mxu0 0
        %1569 = vmatprep.subr.bf16.mxu0 0
        %1570 = vmatpush1.bf16.msra.mxu0 0
        %1571 = vmatprep.subr.bf16.mxu0 0
        %1572 = vmatpush1.bf16.msra.mxu0 0
        %1573 = vmatprep.subr.bf16.mxu0 0
        %1574 = vmatpush1.bf16.msra.mxu0 0
        %1575 = vmatprep.mubr.bf16.mxu0 0
        %1576 = vmatmul.mubr.bf16.gmra.mrb[0].mxu0 %v1211
        %v1577 = vpop.f32.mrb[0].mxu0
        %v1578 = vadd.f32 %v1535, %v1577
        %v1579 = vpop.f32.mrb[0].mxu0
        %v1580 = vadd.f32 %v1537, %v1579
        %v1581 = vpop.f32.mrb[0].mxu0
        %v1582 = vadd.f32 %v1539, %v1581
        %v1583 = vpop.f32.mrb[0].mxu0
        %v1584 = vadd.f32 %v1541, %v1583
        %1585 = vdwg.mxu0
        %v1586 = vadd.f32 %v1205, %v1578
        %v1587 = vadd.f32 %v1206, %v1580
        %v1588 = vadd.f32 %v1207, %v1582
        %v1589 = vadd.f32 %v1208, %v1584
        %1590 = vst [vmem:[#allocation8] sm:$0xff] %v1586
        %1591 = vst [vmem:[#allocation8 + $0x8] sm:$0xff] %v1587
        %1592 = vst [vmem:[#allocation8 + $0x10] sm:$0xff] %v1588
        %1593 = vst [vmem:[#allocation8 + $0x18] sm:$0xff] %v1589
        // Predicated region
        $region53: #{_feed_forward_call.1} parent=35 // pred_check
          %p1594 = pneg %p156
        $region54: #{_feed_forward_call.1} parent=35 // pred_check_branch
          %1596 = sbr.rel (%p1594) target = $region56
        $region55: #{_feed_forward_call.1} parent=35 // pred_region
          %s1597 = smul.u32 2, %s26
          %s1599 = ssub.s32 512, 512
          %1600 = vsyncadd [#allocation4], %s1599
          %s1601 = smul.addr %s1597, 2
          %s1602 = smul.addr %s1601, 128
          %s1603 = scalar_lea.hbm %s4, %s1602
          %s1604 = sshll.u32 [#allocation8], 4
          %s1605 = int_to_ptr.vmem [resolvable:$true] %s1604
          %1610 = dma.vmem_to_hbm [thread:$0]  %s1605, 512, %s1603, [#allocation4], 256, 256, 16
        $region56: #{_feed_forward_call.1} parent=35 // pred_fallthru
          _
        // Predicated region
        $region57: #{_feed_forward_call.1} parent=35 // pred_check
          %p1611 = pneg %p156
        $region58: #{_feed_forward_call.1} parent=35 // pred_check_branch
          %1613 = sbr.rel (%p1611) target = $region60
        $region59: #{_feed_forward_call.1} parent=35 // pred_region
          %1614 = dma.done [#allocation4], 512
        $region60: #{_feed_forward_call.1} parent=35 // pred_fallthru
          _
      $region36: #{_feed_forward_call.1} parent=5 // pred_fallthru
        _
      %p1615 = scmp.le.s32.totalorder 2, %s17
      // Predicated region
      $region61: #{_feed_forward_call.1} parent=5 // pred_check
        %p1616 = pneg %p1615
      $region62: #{_feed_forward_call.1} parent=5 // pred_check_branch
        %1618 = sbr.rel (%p1616) target = $region64
      $region63: #{_feed_forward_call.1} parent=5 // pred_region
        %s1619 = ssub.s32 %s17, 2
      $region64: #{_feed_forward_call.1} parent=5 // pred_fallthru
        _
    $region6: #{_feed_forward_call.1} parent=1 // loop_footer
      %s21 = sadd.s32 1, %s17
    $region7: #{_feed_forward_call.1} parent=1 // loop_footer_branch
      %16 = sbr.rel target = $region3
    $region8: #{_feed_forward_call.1} parent=1 // loop_exit
      _
    %1620 = vsyncpa [#allocation3], 1
    %s1621 = scalar_lea.sflag [#allocation3], 1
    %1622 = vsyncpa %s1621, 1
    %1623 = vsyncpa [#allocation6], 1
    %s1624 = scalar_lea.sflag [#allocation6], 1
    %1625 = vsyncpa %s1624, 1
    %1626 = vsyncpa [#allocation4], 1
    %s1627 = scalar_lea.sflag [#allocation4], 1
    %1628 = vsyncpa %s1627, 1

</llo_original>
